<compile_context>
chip_gen: v7x
topology: tpu7x:2x2x1
jax: 0.10.0
libtpu: 0.0.40
codegen_flags: <defaults>
</compile_context>

<pallas_src>
import functools

import numpy as np
import jax
import jax.numpy as jnp
from jax.experimental import pallas as pl
from jax.experimental.pallas import tpu as pltpu


def _round_up(x: int, m: int) -> int:
    return ((x + m - 1) // m) * m


# ----------------------------------------------------------------------------
# Host-side constants: Slaney-style mel filterbank (librosa.filters.mel defaults:
# htk=False, norm="slaney"), built deterministically in numpy.
# ----------------------------------------------------------------------------
def _hz_to_mel(freqs):
    freqs = np.asarray(freqs, dtype=np.float64)
    f_min, f_sp = 0.0, 200.0 / 3.0
    mels = (freqs - f_min) / f_sp
    min_log_hz = 1000.0
    min_log_mel = (min_log_hz - f_min) / f_sp
    logstep = np.log(6.4) / 27.0
    mels = np.where(
        freqs >= min_log_hz,
        min_log_mel + np.log(np.maximum(freqs, 1e-12) / min_log_hz) / logstep,
        mels,
    )
    return mels


def _mel_to_hz(mels):
    mels = np.asarray(mels, dtype=np.float64)
    f_min, f_sp = 0.0, 200.0 / 3.0
    freqs = f_min + f_sp * mels
    min_log_hz = 1000.0
    min_log_mel = (min_log_hz - f_min) / f_sp
    logstep = np.log(6.4) / 27.0
    freqs = np.where(
        mels >= min_log_mel,
        min_log_hz * np.exp(logstep * (mels - min_log_mel)),
        freqs,
    )
    return freqs


def mel_filterbank(sr, n_fft, n_mels, fmin, fmax):
    n_freq = n_fft // 2 + 1
    fftfreqs = np.linspace(0.0, sr / 2.0, n_freq)
    mel_pts = np.linspace(_hz_to_mel(fmin), _hz_to_mel(fmax), n_mels + 2)
    mel_f = _mel_to_hz(mel_pts)
    fdiff = np.diff(mel_f)
    ramps = mel_f[:, None] - fftfreqs[None, :]
    weights = np.zeros((n_mels, n_freq), dtype=np.float64)
    for i in range(n_mels):
        lower = -ramps[i] / fdiff[i]
        upper = ramps[i + 2] / fdiff[i + 1]
        weights[i] = np.maximum(0.0, np.minimum(lower, upper))
    enorm = 2.0 / (mel_f[2: n_mels + 2] - mel_f[:n_mels])  # Slaney normalization
    weights *= enorm[:, None]
    return weights.astype(np.float32)  # (n_mels, n_freq)


_DB = 10.0 / np.log(10.0)   # 10*log10(x) == _DB * ln(x)
_AMIN = 1e-10               # librosa power_to_db amin


# ----------------------------------------------------------------------------
# Pallas pass-1 kernel: per (batch, time-tile) dB-scale mel spectrogram + tile max.
#   slab_ref : (1, 1, tile+n_extra, hop)    bf16 hop-blocked audio (overlap n_extra)
#   basis_ref: (n_fft, 2*n_freq_pad)        bf16 window-folded [cos | -sin] DFT basis
#   melfb_ref: (n_freq_pad, n_mels_pad)     bf16 mel filterbank (transposed, padded)
#   out_ref  : (1, tile, n_mels_pad)        f32 10*log10(max(mel, amin))  (lane-dense)
#   tmax_ref : (1, 8, n_mels_pad)           f32 per-lane max over *valid* rows
# ----------------------------------------------------------------------------
def _logmel_pass1_kernel(slab_ref, basis_ref, melfb_ref, out_ref, tmax_ref,
                         *, hop, n_fft, n_valid_frames):
    n_freq_pad, n_mels_pad = melfb_ref.shape
    tile = out_ref.shape[1]
    n_splits = (n_fft + hop - 1) // hop

    # Frame t = concat_j( blocks[t+j][:chunk_j] ), so the windowed DFT matmul splits
    # into n_splits shifted-slab matmuls that all read the same VMEM slab block.
    z = None
    for j in range(n_splits):
        k0 = j * hop
        k1 = min(k0 + hop, n_fft)
        xj = slab_ref[0, 0, j:j + tile, 0:k1 - k0]              # (tile, k1-k0) bf16
        part = jnp.dot(xj, basis_ref[k0:k1, :],
                       preferred_element_type=jnp.float32)      # (tile, 2*n_freq_pad)
        z = part if z is None else z + part

    re = z[:, :n_freq_pad]
    im = z[:, n_freq_pad:]
    power = re * re + im * im                                   # |STFT|^2, f32 on VPU

    # Mel filterbank on the fast bf16 MXU path (f32 accumulation).
    mel = jnp.dot(power.astype(jnp.bfloat16), melfb_ref[...],
                  preferred_element_type=jnp.float32)           # (tile, n_mels_pad)

    # power_to_db numerator folded in: log runs on the otherwise-idle EUP.
    logmel = jnp.float32(_DB) * jnp.log(jnp.maximum(mel, jnp.float32(_AMIN)))
    out_ref[0] = logmel

    # Per-tile per-lane max over valid frames only; rows >= n_valid_frames read
    # reflect-padded tail audio and must not contribute to ref = max(mel).
    base = pl.program_id(1) * tile
    row = jax.lax.broadcasted_iota(jnp.int32, (tile, n_mels_pad), 0)
    masked = jnp.where(row < (n_valid_frames - base), logmel, jnp.float32(-1e30))
    lane_max = jnp.max(masked, axis=0, keepdims=True)           # (1, n_mels_pad)
    tmax_ref[0] = jnp.broadcast_to(lane_max, (8, n_mels_pad))


# ----------------------------------------------------------------------------
# Wrapper mirroring LogMelLIBROSA.forward
# ----------------------------------------------------------------------------
class LogMelLIBROSAPallas:
    def __init__(self, fs=16000, n_mels=80, n_fft=400, hop_length=160,
                 fmin=0.0, fmax=None, time_tile=1024):
        self.fs = fs
        self.n_mels = n_mels
        self.n_fft = n_fft
        self.hop_length = hop_length
        self.fmin = fmin
        self.fmax = fmax if fmax is not None else fs // 2
        self.n_freq = n_fft // 2 + 1
        self.n_freq_pad = _round_up(self.n_freq, 128)            # 201 -> 256
        self.n_mels_pad = _round_up(n_mels, 128)                 # 80  -> 128
        self.n_splits = (n_fft + hop_length - 1) // hop_length   # 3 hop-chunks / frame
        self.time_tile = time_tile

        # ---- window-folded real-DFT basis (bf16): [cos | -sin], freq-padded ----
        n = np.arange(n_fft, dtype=np.float64)
        window = 0.5 - 0.5 * np.cos(2.0 * np.pi * n / n_fft)     # periodic Hann
        k = np.arange(self.n_freq, dtype=np.float64)
        phase = 2.0 * np.pi * np.outer(n, k) / n_fft             # (n_fft, n_freq)
        basis = np.zeros((n_fft, 2 * self.n_freq_pad), dtype=np.float64)
        basis[:, : self.n_freq] = window[:, None] * np.cos(phase)
        basis[:, self.n_freq_pad: self.n_freq_pad + self.n_freq] = (
            -window[:, None] * np.sin(phase)
        )
        self.basis = jnp.asarray(basis, dtype=jnp.bfloat16)      # (n_fft, 2*n_freq_pad)

        # ---- mel filterbank, transposed + padded, stored bf16 (bf16 MXU path) ----
        melfb = mel_filterbank(fs, n_fft, n_mels, fmin, self.fmax)
        melfb_pad = np.zeros((self.n_freq_pad, self.n_mels_pad), dtype=np.float32)
        melfb_pad[: self.n_freq, :n_mels] = melfb.T
        self.mel_fb = jnp.asarray(melfb_pad, dtype=jnp.bfloat16)  # (n_freq_pad, n_mels_pad)

        self._forward = jax.jit(self._forward_impl)

    def _forward_impl(self, feat, ilens):
        B, n_samples = feat.shape
        n_fft, hop = self.n_fft, self.hop_length
        pad = n_fft // 2
        n_extra = self.n_splits - 1

        # librosa.stft(center=True): pad n_fft//2 on each side.
        # (older librosa default pad_mode='reflect'; newer uses 'constant')
        padded = jnp.pad(feat, ((0, 0), (pad, pad)), mode="reflect").astype(jnp.bfloat16)

        T = 1 + n_samples // hop
        tile = min(self.time_tile, _round_up(T, 16))              # 16 = bf16 sublane pack
        # v7x megacore: keep >= 2 grid steps when possible so both TCs get work.
        while B * pl.cdiv(T, tile) < 2 and tile > 16:
            tile = _round_up(tile // 2, 16)
        n_tiles = pl.cdiv(T, tile)
        T_grid = n_tiles * tile

        # Hop-blocked audio slab with an n_extra-block overlap between tiles:
        # tile i needs hop-blocks [i*tile, i*tile + tile + n_extra).  This is ~1.0x raw
        # audio in HBM instead of the 2.5x materialized frames array of v2.
        n_blocks = T_grid + n_extra
        L_need = n_blocks * hop
        cur = padded.shape[1]
        if cur < L_need:
            padded = jnp.pad(padded, ((0, 0), (0, L_need - cur)))
        elif cur > L_need:
            padded = padded[:, :L_need]                           # never drops valid-frame samples
        blocks = padded.reshape(B, n_blocks, hop)
        slab = jnp.stack(
            [blocks[:, i * tile: i * tile + tile + n_extra] for i in range(n_tiles)],
            axis=1,
        )                                                          # (B, n_tiles, tile+n_extra, hop)

        kernel = functools.partial(_logmel_pass1_kernel,
                                   hop=hop, n_fft=n_fft, n_valid_frames=T)

        flops = int(2 * B * T_grid * (n_fft * 2 * self.n_freq_pad
                                      + self.n_freq_pad * self.n_mels_pad)
                    + 3 * B * T_grid * self.n_freq_pad)
        transcendentals = int(B * T_grid * self.n_mels_pad)
        bytes_accessed = int(slab.size * 2 + self.basis.size * 2 + self.mel_fb.size * 2
                             + B * T_grid * self.n_mels_pad * 4
                             + B * n_tiles * 8 * self.n_mels_pad * 4)

        logmel, tmax = pl.pallas_call(
            kernel,
            out_shape=(
                jax.ShapeDtypeStruct((B, T_grid, self.n_mels_pad), jnp.float32),
                jax.ShapeDtypeStruct((B, n_tiles * 8, self.n_mels_pad), jnp.float32),
            ),
            grid_spec=pltpu.PrefetchScalarGridSpec(
                num_scalar_prefetch=0,
                grid=(B, n_tiles),
                in_specs=[
                    pl.BlockSpec((1, 1, tile + n_extra, hop), lambda b, t: (b, t, 0, 0)),
                    pl.BlockSpec((n_fft, 2 * self.n_freq_pad), lambda b, t: (0, 0)),
                    pl.BlockSpec((self.n_freq_pad, self.n_mels_pad), lambda b, t: (0, 0)),
                ],
                out_specs=[
                    pl.BlockSpec((1, tile, self.n_mels_pad), lambda b, t: (b, t, 0)),
                    pl.BlockSpec((1, 8, self.n_mels_pad), lambda b, t: (b, t, 0)),
                ],
            ),
            compiler_params=pltpu.CompilerParams(
                dimension_semantics=("parallel", "parallel"),
                # per-step VMEM at tile=1024 is ~8 MiB; 32 MiB leaves >=4x headroom
                # even on v7x (64 MiB physical).
                vmem_limit_bytes=32 * 1024 * 1024,
            ),
            cost_estimate=pl.CostEstimate(
                flops=flops,
                transcendentals=transcendentals,
                bytes_accessed=bytes_accessed,
            ),
        )(slab, self.basis, self.mel_fb)

        # ---- pass 2: rest of librosa.power_to_db(ref=np.max, amin=1e-10, top_db=80) --
        # 10*log10(max(mel, amin)) already happened in-kernel, so this is only
        # subtract-ref + clamp + length-mask (fully fused elementwise in XLA).
        ref_db = jnp.max(tmax.reshape(B, -1), axis=1)              # per-utterance 10*log10(max mel)
        log_spec = logmel[:, :T, : self.n_mels] - ref_db[:, None, None]
        # top_db clamp: max(log_spec) == 0 exactly because ref == max(mel)
        log_spec = jnp.maximum(log_spec, jnp.float32(-80.0))

        # make_pad_mask along the time axis; masked positions set to 0.0
        t_idx = jnp.arange(T, dtype=jnp.int32)[None, :, None]
        out = jnp.where(t_idx >= ilens[:, None, None], jnp.float32(0.0), log_spec)
        return out

    def __call__(self, feat, ilens=None):
        B, n_samples = feat.shape
        T = 1 + n_samples // self.hop_length
        if ilens is None:
            ilens_arr = jnp.full((B,), T, dtype=jnp.int32)
        else:
            ilens_arr = ilens.astype(jnp.int32)
        out = self._forward(feat, ilens_arr)
        return out, ilens_arr


if __name__ == "__main__":
    key = jax.random.PRNGKey(0)
    B, n_samples = 2, 1600                       # 1600 samples @ hop 160 -> 11 frames
    wav = jax.random.normal(key, (B, n_samples), dtype=jnp.float32)

    module = LogMelLIBROSAPallas(fs=16000, n_mels=80, n_fft=400, hop_length=160)

    T = 1 + n_samples // 160
    logmel, lens = module(wav)
    logmel = jax.block_until_ready(logmel)
    lens = jax.block_until_ready(lens)

    assert logmel.shape == (B, T, 80)
    assert lens.shape == (B,)
    assert bool(jnp.all(jnp.isfinite(logmel)))
    # power_to_db(ref=max, top_db=80) guarantees values in [-80, 0]
    assert bool(jnp.all(logmel <= 1e-3)) and bool(jnp.all(logmel >= -80.0 - 1e-3))

    # exercise the ilens masking path
    ilens = jnp.array([T, T - 3], dtype=jnp.int32)
    logmel2, lens2 = module(wav, ilens)
    logmel2 = jax.block_until_ready(logmel2)
    assert bool(jnp.all(logmel2[1, T - 3:, :] == 0.0))
    assert bool(jnp.all(jnp.isfinite(logmel2)))

    print("KERNEL_OK")
</pallas_src>

<mosaic_0001>
module attributes {stable_mosaic.version = 11 : i64} {
  func.func @_logmel_pass1_kernel(%arg0: i32, %arg1: i32, %arg2: memref<1x1x18x160xbf16, #tpu.memory_space<vmem>>, %arg3: memref<400x512xbf16, #tpu.memory_space<vmem>>, %arg4: memref<256x128xbf16, #tpu.memory_space<vmem>>, %arg5: memref<1x16x128xf32, #tpu.memory_space<vmem>>, %arg6: memref<1x8x128xf32, #tpu.memory_space<vmem>>) attributes {dimension_semantics = [#tpu.dimension_semantics<parallel>, #tpu.dimension_semantics<parallel>], iteration_bounds = array<i64: 2, 1>, scalar_prefetch = 0 : i64, scratch_operands = 0 : i64, tpu.core_type = #tpu.core_type<tc>, window_params = [{transform_indices = @transform_0, window_bounds = array<i64: 1, 1, 18, 160>}, {pipeline_mode = #tpu.pipeline_mode<synchronous>, transform_indices = @transform_1, window_bounds = array<i64: 400, 512>}, {pipeline_mode = #tpu.pipeline_mode<synchronous>, transform_indices = @transform_2, window_bounds = array<i64: 256, 128>}, {transform_indices = @transform_3, window_bounds = array<i64: 1, 16, 128>}, {transform_indices = @transform_4, window_bounds = array<i64: 1, 8, 128>}]} {
    %c0 = arith.constant 0 : index
    %c0_0 = arith.constant 0 : index
    %c0_1 = arith.constant 0 : index
    %c0_2 = arith.constant 0 : index
    %0 = vector.load %arg2[%c0, %c0_0, %c0_1, %c0_2] : memref<1x1x18x160xbf16, #tpu.memory_space<vmem>>, vector<1x1x16x160xbf16>
    %1 = vector.shape_cast %0 : vector<1x1x16x160xbf16> to vector<16x160xbf16>
    %c0_3 = arith.constant 0 : index
    %c0_4 = arith.constant 0 : index
    %2 = vector.load %arg3[%c0_3, %c0_4] : memref<400x512xbf16, #tpu.memory_space<vmem>>, vector<160x512xbf16>
    %cst = arith.constant dense<0.000000e+00> : vector<16x512xf32>
    %3 = tpu.matmul %1, %2, %cst {dimension_numbers = #tpu.dot_dimension_numbers<[1], [0], [0], [1], [0, 0, 1, 1], [], []>} : vector<16x160xbf16>, vector<160x512xbf16>, vector<16x512xf32> -> vector<16x512xf32>
    %c0_5 = arith.constant 0 : index
    %c0_6 = arith.constant 0 : index
    %c1 = arith.constant 1 : index
    %c0_7 = arith.constant 0 : index
    %4 = vector.load %arg2[%c0_5, %c0_6, %c1, %c0_7] : memref<1x1x18x160xbf16, #tpu.memory_space<vmem>>, vector<1x1x16x160xbf16>
    %5 = vector.shape_cast %4 : vector<1x1x16x160xbf16> to vector<16x160xbf16>
    %c160 = arith.constant 160 : index
    %c0_8 = arith.constant 0 : index
    %6 = vector.load %arg3[%c160, %c0_8] : memref<400x512xbf16, #tpu.memory_space<vmem>>, vector<160x512xbf16>
    %cst_9 = arith.constant dense<0.000000e+00> : vector<16x512xf32>
    %7 = tpu.matmul %5, %6, %cst_9 {dimension_numbers = #tpu.dot_dimension_numbers<[1], [0], [0], [1], [0, 0, 1, 1], [], []>} : vector<16x160xbf16>, vector<160x512xbf16>, vector<16x512xf32> -> vector<16x512xf32>
    %8 = arith.addf %3, %7 : vector<16x512xf32>
    %c0_10 = arith.constant 0 : index
    %c0_11 = arith.constant 0 : index
    %c2 = arith.constant 2 : index
    %c0_12 = arith.constant 0 : index
    %9 = vector.load %arg2[%c0_10, %c0_11, %c2, %c0_12] : memref<1x1x18x160xbf16, #tpu.memory_space<vmem>>, vector<1x1x16x80xbf16>
    %10 = vector.shape_cast %9 : vector<1x1x16x80xbf16> to vector<16x80xbf16>
    %c320 = arith.constant 320 : index
    %c0_13 = arith.constant 0 : index
    %11 = vector.load %arg3[%c320, %c0_13] : memref<400x512xbf16, #tpu.memory_space<vmem>>, vector<80x512xbf16>
    %cst_14 = arith.constant dense<0.000000e+00> : vector<16x512xf32>
    %12 = tpu.matmul %10, %11, %cst_14 {dimension_numbers = #tpu.dot_dimension_numbers<[1], [0], [0], [1], [0, 0, 1, 1], [], []>} : vector<16x80xbf16>, vector<80x512xbf16>, vector<16x512xf32> -> vector<16x512xf32>
    %13 = arith.addf %8, %12 : vector<16x512xf32>
    %14 = vector.extract_strided_slice %13 {offsets = [0, 0], sizes = [16, 256], strides = [1, 1]} : vector<16x512xf32> to vector<16x256xf32>
    %15 = vector.extract_strided_slice %13 {offsets = [0, 256], sizes = [16, 256], strides = [1, 1]} : vector<16x512xf32> to vector<16x256xf32>
    %16 = arith.mulf %14, %14 : vector<16x256xf32>
    %17 = arith.mulf %15, %15 : vector<16x256xf32>
    %18 = arith.addf %16, %17 : vector<16x256xf32>
    %19 = arith.truncf %18 : vector<16x256xf32> to vector<16x256xbf16>
    %c0_15 = arith.constant 0 : index
    %c0_16 = arith.constant 0 : index
    %20 = vector.load %arg4[%c0_15, %c0_16] : memref<256x128xbf16, #tpu.memory_space<vmem>>, vector<256x128xbf16>
    %cst_17 = arith.constant dense<0.000000e+00> : vector<16x128xf32>
    %21 = tpu.matmul %19, %20, %cst_17 {dimension_numbers = #tpu.dot_dimension_numbers<[1], [0], [0], [1], [0, 0, 1, 1], [], []>} : vector<16x256xbf16>, vector<256x128xbf16>, vector<16x128xf32> -> vector<16x128xf32>
    %cst_18 = arith.constant 1.000000e-10 : f32
    %22 = vector.broadcast %cst_18 : f32 to vector<16x128xf32>
    %23 = arith.maximumf %21, %22 : vector<16x128xf32>
    %24 = math.log %23 : vector<16x128xf32>
    %cst_19 = arith.constant 4.34294462 : f32
    %25 = vector.broadcast %cst_19 : f32 to vector<16x128xf32>
    %26 = arith.mulf %25, %24 : vector<16x128xf32>
    %c0_20 = arith.constant 0 : index
    %c0_21 = arith.constant 0 : index
    %c0_22 = arith.constant 0 : index
    %27 = vector.load %arg5[%c0_20, %c0_21, %c0_22] : memref<1x16x128xf32, #tpu.memory_space<vmem>>, vector<1x16x128xf32>
    %28 = vector.shape_cast %27 : vector<1x16x128xf32> to vector<16x128xf32>
    %29 = vector.shape_cast %26 : vector<16x128xf32> to vector<1x16x128xf32>
    tpu.vector_store %arg5[%c0_20, %c0_21, %c0_22], %29 {strides = array<i32>} : memref<1x16x128xf32, #tpu.memory_space<vmem>>, vector<1x16x128xf32>,
    %c16_i32 = arith.constant 16 : i32
    %30 = arith.muli %arg1, %c16_i32 : i32
    %31 = tpu.iota {dimensions = array<i32: 0>} : vector<16x128xi32>
    %c11_i32 = arith.constant 11 : i32
    %32 = arith.subi %c11_i32, %30 : i32
    %33 = vector.broadcast %32 : i32 to vector<16x128xi32>
    %34 = arith.cmpi slt, %31, %33 : vector<16x128xi32>
    %cst_23 = arith.constant -1.000000e+30 : f32
    %35 = vector.broadcast %cst_23 : f32 to vector<16x128xf32>
    %36 = arith.select %34, %26, %35 : vector<16x128xi1>, vector<16x128xf32>
    %cst_24 = arith.constant dense<0xFF800000> : vector<128xf32>
    %37 = vector.multi_reduction <maximumf>, %36, %cst_24 [0] : vector<16x128xf32> to vector<128xf32>
    %38 = vector.shape_cast %37 : vector<128xf32> to vector<1x128xf32>
    %39 = vector.shape_cast %38 : vector<1x128xf32> to vector<1x128xf32>
    %40 = vector.broadcast %39 : vector<1x128xf32> to vector<8x128xf32>
    %c0_25 = arith.constant 0 : index
    %c0_26 = arith.constant 0 : index
    %c0_27 = arith.constant 0 : index
    %41 = vector.load %arg6[%c0_25, %c0_26, %c0_27] : memref<1x8x128xf32, #tpu.memory_space<vmem>>, vector<1x8x128xf32>
    %42 = vector.shape_cast %41 : vector<1x8x128xf32> to vector<8x128xf32>
    %43 = vector.shape_cast %40 : vector<8x128xf32> to vector<1x8x128xf32>
    tpu.vector_store %arg6[%c0_25, %c0_26, %c0_27], %43 {strides = array<i32>} : memref<1x8x128xf32, #tpu.memory_space<vmem>>, vector<1x8x128xf32>,
    return
  }
  func.func @transform_0(%arg0: i32, %arg1: i32) -> (i32, i32, i32, i32) {
    %c0_i32 = arith.constant 0 : i32
    %c0_i32_0 = arith.constant 0 : i32
    %c0_i32_1 = arith.constant 0 : i32
    return %arg0, %arg1, %c0_i32, %c0_i32_0 : i32, i32, i32, i32
  }
  func.func @transform_1(%arg0: i32, %arg1: i32) -> (i32, i32) {
    %c0_i32 = arith.constant 0 : i32
    %c0_i32_0 = arith.constant 0 : i32
    %c0_i32_1 = arith.constant 0 : i32
    return %c0_i32, %c0_i32_0 : i32, i32
  }
  func.func @transform_2(%arg0: i32, %arg1: i32) -> (i32, i32) {
    %c0_i32 = arith.constant 0 : i32
    %c0_i32_0 = arith.constant 0 : i32
    %c0_i32_1 = arith.constant 0 : i32
    return %c0_i32, %c0_i32_0 : i32, i32
  }
  func.func @transform_3(%arg0: i32, %arg1: i32) -> (i32, i32, i32) {
    %c0_i32 = arith.constant 0 : i32
    %c0_i32_0 = arith.constant 0 : i32
    return %arg0, %arg1, %c0_i32 : i32, i32, i32
  }
  func.func @transform_4(%arg0: i32, %arg1: i32) -> (i32, i32, i32) {
    %c0_i32 = arith.constant 0 : i32
    %c0_i32_0 = arith.constant 0 : i32
    return %arg0, %arg1, %c0_i32 : i32, i32, i32
  }
}

</mosaic_0001>

<llo_original>
// kernel: reverse
$region0: #{reverse}
  %s0 = inlined_call_operand.vmem [shape: bf16[2,256], index: 0, kind: input, shape index: {}]
  %s1 = inlined_call_operand.vmem [shape: bf16[2,256], index: 1, kind: output, shape index: {}]
  %v2 = vlaneseq
  %v3 = vsub.s32 127, %v2
  %4 = vset.pattern.permute.xlu0 %v3
  $region1: #{reverse} parent=0
    #allocation0 [shape = 'u8[4096]{0}', space=vmem, size = 0x1000, scoped, tag = 'operand span for operand 0']
    #allocation1 [shape = 'u8[1024]{0}', space=vmem, size = 0x400, scoped, tag = 'packed  for operand 0']
    #allocation2 [shape = 'u8[4096]{0}', space=vmem, size = 0x1000, scoped, tag = 'operand span for operand 1']
    #allocation3 [shape = 'u8[1024]{0}', space=vmem, size = 0x400, scoped, tag = 'packed  for operand 1']
    loop: start=0, step=1, limit=4
    $region2: #{reverse} parent=1 // loop_pre_header
      _
    $region3: #{reverse} parent=1 // loop_header
      %s6 = sphi 0, %s10
      %p7 = scmp.ge.s32.totalorder %s6, 4
      %s13 = sphi 0, %s25
      %s14 = sphi 0, %s21
      %s15 = sphi 0, %s13
      %s16 = sphi 0, %s14
      %s17 = sphi 0, %s15
      %s18 = sphi 0, %s16
    $region4: #{reverse} parent=1 // loop_header_branch
      %9 = sbr.rel (%p7) target = $region8
    $region5: #{reverse} parent=1 // loop_body
      %s11 = ssub.s32 %s6, 1
      %s12 = ssub.s32 %s6, 2
      %s19 = sadd.s32 1, %s14
      %p20 = scmp.ge.s32.totalorder %s19, 2
      %s21 = scalar_select %p20, 0, %s19
      %s22 = sadd.s32 1, %s13
      %s23 = scalar_select %p20, %s22, %s13
      %p24 = scmp.ge.s32.totalorder %s23, 1
      %s25 = scalar_select %p24, 0, %s23
      %p26 = scmp.le.s32.totalorder 1, %s6
      %p27 = scmp.lt.s32.totalorder %s6, 3
      %p28 = pnand %p26, %p27
      %p29 = pneg %p28
      // Predicated region
      $region9: #{reverse} parent=5 // pred_check
        _
      $region10: #{reverse} parent=5 // pred_check_branch
        %31 = sbr.rel (%p28) target = $region12
      $region11: #{reverse} parent=5 // pred_region
        %s32 = ssub.s32 %s6, 1
      $region12: #{reverse} parent=5 // pred_fallthru
        _
      %p33 = scmp.lt.s32.totalorder %s6, 2
      // Predicated region
      $region13: #{reverse} parent=5 // pred_check
        %p34 = pneg %p33
      $region14: #{reverse} parent=5 // pred_check_branch
        %36 = sbr.rel (%p34) target = $region16
      $region15: #{reverse} parent=5 // pred_region
        %s37 = sand.u32 %s6, 1
        %s38 = sand.u32 %s6, 1
        %s39 = scalar_lea.vmem [#allocation1], %s38
        %s40 = ssub.s32 1, %s14
        %s41 = smul.addr %s13, 2
        %s42 = sadd.s32 %s40, %s41
        %s43 = scalar_lea.vmem %s0, %s42
        // Predicated region
        $region17: #{reverse} parent=15 // pred_check
          _
        $region18: #{reverse} parent=15 // pred_check_branch
          %45 = sbr.rel (0) target = $region20
        $region19: #{reverse} parent=15 // pred_region
          // Predicated region
          $region21: #{reverse} parent=19 // pred_check
            _
          $region22: #{reverse} parent=19 // pred_check_branch
            %47 = sbr.rel target = $region24
          $region23: #{reverse} parent=19 // pred_region
            // Predicated region
            $region36: #{reverse} parent=23 // pred_check
              _
            $region37: #{reverse} parent=23 // pred_check_branch
              %62 = sbr.rel (0) target = $region39
            $region38: #{reverse} parent=23 // pred_region
              loop: start=0, step=1, limit=1
              $region40: #{reverse} parent=38 // loop_pre_header
                _
              $region41: #{reverse} parent=38 // loop_header
                %s65 = sphi 0, %s69
                %p66 = scmp.ge.s32.totalorder %s65, 1
                %s70 = sphi %s43, %s43
                %s71 = sphi %s39, %s39
              $region42: #{reverse} parent=38 // loop_header_branch
                %68 = sbr.rel (%p66) target = $region46
              $region43: #{reverse} parent=38 // loop_body
                %v72 = vld [vmem:[%s70] sm:$0x1]
                %73 = vst [vmem:[%s71] sm:$0x1] %v72
              $region44: #{reverse} parent=38 // loop_footer
                %s69 = sadd.s32 1, %s65
              $region45: #{reverse} parent=38 // loop_footer_branch
                %64 = sbr.rel target = $region41
              $region46: #{reverse} parent=38 // loop_exit
                _
            $region39: #{reverse} parent=23 // pred_fallthru
              _
          $region24: #{reverse} parent=19 // pred_fallthru
            _
          // Predicated region
          $region25: #{reverse} parent=19 // pred_check
            _
          $region26: #{reverse} parent=19 // pred_check_branch
            %49 = sbr.rel (0) target = $region28
          $region27: #{reverse} parent=19 // pred_region
            loop: start=0, step=1, limit=1
            $region29: #{reverse} parent=27 // loop_pre_header
              _
            $region30: #{reverse} parent=27 // loop_header
              %s52 = sphi 0, %s56
              %p53 = scmp.ge.s32.totalorder %s52, 1
              %s57 = sphi %s43, %s43
              %s58 = sphi %s39, %s39
            $region31: #{reverse} parent=27 // loop_header_branch
              %55 = sbr.rel (%p53) target = $region35
            $region32: #{reverse} parent=27 // loop_body
              %v59 = vld [vmem:[%s57] sm:$0x1]
              %60 = vst [vmem:[%s58] sm:$0x1] %v59
            $region33: #{reverse} parent=27 // loop_footer
              %s56 = sadd.s32 1, %s52
            $region34: #{reverse} parent=27 // loop_footer_branch
              %51 = sbr.rel target = $region30
            $region35: #{reverse} parent=27 // loop_exit
              _
          $region28: #{reverse} parent=19 // pred_fallthru
            _
        $region20: #{reverse} parent=15 // pred_fallthru
          _
        %74 = vnop
      $region16: #{reverse} parent=5 // pred_fallthru
        _
      %p75 = scmp.le.s32.totalorder 1, %s6
      %p76 = scmp.lt.s32.totalorder %s6, 3
      %p77 = pnand %p75, %p76
      %p78 = pneg %p77
      // Predicated region
      $region47: #{reverse} parent=5 // pred_check
        _
      $region48: #{reverse} parent=5 // pred_check_branch
        %80 = sbr.rel (%p77) target = $region50
      $region49: #{reverse} parent=5 // pred_region
        %s81 = ssub.s32 %s6, 1
        %s82 = sand.u32 %s11, 1
        %s83 = sand.u32 %s11, 1
        %s84 = scalar_lea.vmem [#allocation1], %s83
        %s85 = sand.u32 %s11, 1
        %s86 = sand.u32 %s11, 1
        %s87 = scalar_lea.vmem [#allocation1], %s86
        %s88 = sand.u32 %s11, 1
        %s89 = sand.u32 %s11, 1
        %s90 = scalar_lea.vmem [#allocation3], %s89
        %s92 = smul.u32 1, 2
        %s93 = sshllo.u32 0, %s92
        %s94 = sshrl.u32 %s93, 1
        %s95 = sor.u32 %s93, %s94
        %s96 = sand.u32 %s95, 85
        %s97 = sshrl.u32 %s96, 1
        %s98 = sor.u32 %s96, %s97
        %s99 = sand.u32 51, %s98
        %s100 = sshrl.u32 %s99, 2
        %s101 = sor.u32 %s99, %s100
        %s102 = sand.u32 15, %s101
        %v103 = vld [vmem:[%s87] sm:%s102]
        %v104 = vunpack.c.l.bf16 %v103
        %v105 = vunpack.c.h.bf16 %v103
        %106 = vst [vmem:[#allocation0] sm:%s93] %v104
        %s107 = ssub.s32 1, %s16
        %v108 = vld [vmem:[#allocation0] sm:$0xff]
        %109 = vperm.xlu0 %4, %v108
        %v110 = vpop.permute.xlu0 %109
        %111 = vst [vmem:[#allocation2] sm:$0xff] %v110
        %s113 = smul.u32 1, 2
        %s114 = sshllo.u32 0, %s113
        %s115 = sshrl.u32 %s113, 1
        %v116 = vld [vmem:[#allocation2] sm:%s114]
        %v117 = vpack.c.bf16 0.0, %v116
        %s118 = sshllo.u32 0, %s115
        %119 = vst [vmem:[%s90] sm:%s118] %v117
        %s120 = sand.u32 %s11, 1
        %s121 = sand.u32 %s11, 1
        %s122 = scalar_lea.vmem [#allocation3], %s121
        %s123 = smul.addr %s15, 2
        %s124 = sadd.s32 %s16, %s123
        %s125 = scalar_lea.vmem %s1, %s124
        // Predicated region
        $region51: #{reverse} parent=49 // pred_check
          _
        $region52: #{reverse} parent=49 // pred_check_branch
          %127 = sbr.rel (0) target = $region54
        $region53: #{reverse} parent=49 // pred_region
          // Predicated region
          $region55: #{reverse} parent=53 // pred_check
            _
          $region56: #{reverse} parent=53 // pred_check_branch
            %129 = sbr.rel target = $region58
          $region57: #{reverse} parent=53 // pred_region
            // Predicated region
            $region70: #{reverse} parent=57 // pred_check
              _
            $region71: #{reverse} parent=57 // pred_check_branch
              %144 = sbr.rel (0) target = $region73
            $region72: #{reverse} parent=57 // pred_region
              loop: start=0, step=1, limit=1
              $region74: #{reverse} parent=72 // loop_pre_header
                _
              $region75: #{reverse} parent=72 // loop_header
                %s147 = sphi 0, %s151
                %p148 = scmp.ge.s32.totalorder %s147, 1
                %s152 = sphi %s122, %s122
                %s153 = sphi %s125, %s125
              $region76: #{reverse} parent=72 // loop_header_branch
                %150 = sbr.rel (%p148) target = $region80
              $region77: #{reverse} parent=72 // loop_body
                %v154 = vld [vmem:[%s152] sm:$0x1]
                %155 = vst [vmem:[%s153] sm:$0x1] %v154
              $region78: #{reverse} parent=72 // loop_footer
                %s151 = sadd.s32 1, %s147
              $region79: #{reverse} parent=72 // loop_footer_branch
                %146 = sbr.rel target = $region75
              $region80: #{reverse} parent=72 // loop_exit
                _
            $region73: #{reverse} parent=57 // pred_fallthru
              _
          $region58: #{reverse} parent=53 // pred_fallthru
            _
          // Predicated region
          $region59: #{reverse} parent=53 // pred_check
            _
          $region60: #{reverse} parent=53 // pred_check_branch
            %131 = sbr.rel (0) target = $region62
          $region61: #{reverse} parent=53 // pred_region
            loop: start=0, step=1, limit=1
            $region63: #{reverse} parent=61 // loop_pre_header
              _
            $region64: #{reverse} parent=61 // loop_header
              %s134 = sphi 0, %s138
              %p135 = scmp.ge.s32.totalorder %s134, 1
              %s139 = sphi %s122, %s122
              %s140 = sphi %s125, %s125
            $region65: #{reverse} parent=61 // loop_header_branch
              %137 = sbr.rel (%p135) target = $region69
            $region66: #{reverse} parent=61 // loop_body
              %v141 = vld [vmem:[%s139] sm:$0x1]
              %142 = vst [vmem:[%s140] sm:$0x1] %v141
            $region67: #{reverse} parent=61 // loop_footer
              %s138 = sadd.s32 1, %s134
            $region68: #{reverse} parent=61 // loop_footer_branch
              %133 = sbr.rel target = $region64
            $region69: #{reverse} parent=61 // loop_exit
              _
          $region62: #{reverse} parent=53 // pred_fallthru
            _
        $region54: #{reverse} parent=49 // pred_fallthru
          _
        %156 = vnop
      $region50: #{reverse} parent=5 // pred_fallthru
        _
      %p157 = scmp.le.s32.totalorder 2, %s6
      // Predicated region
      $region81: #{reverse} parent=5 // pred_check
        %p158 = pneg %p157
      $region82: #{reverse} parent=5 // pred_check_branch
        %160 = sbr.rel (%p158) target = $region84
      $region83: #{reverse} parent=5 // pred_region
        %s161 = ssub.s32 %s6, 2
        %s162 = sand.u32 %s12, 1
        %s163 = sand.u32 %s12, 1
        %s164 = scalar_lea.vmem [#allocation3], %s163
      $region84: #{reverse} parent=5 // pred_fallthru
        _
    $region6: #{reverse} parent=1 // loop_footer
      %s10 = sadd.s32 1, %s6
    $region7: #{reverse} parent=1 // loop_footer_branch
      %5 = sbr.rel target = $region3
    $region8: #{reverse} parent=1 // loop_exit
      _

// kernel: _forward_impl.1
$region0: #{_forward_impl.1}
  #allocation0 [shape = 'u32[]', space=smem, size = 0x4, offset = 0x4, fixed_abs, tag = 'smem constant byte address 0x4 - core index']
  #allocation1 [shape = 'u32[144,128]{1,0:T(1,128)}', space=vmem, size = 0x12000, scoped, tag = 'internal scratch']
  %s0 = inlined_call_operand.vmem [shape: bf16[2,1,18,160], index: 0, kind: input, shape index: {}]
  %s1 = inlined_call_operand.vmem [shape: bf16[400,512], index: 1, kind: input, shape index: {}]
  %s2 = inlined_call_operand.vmem [shape: bf16[256,128], index: 2, kind: input, shape index: {}]
  %s3 = inlined_call_operand.vmem [shape: f32[2,16,128], index: 3, kind: output, shape index: {0}]
  %s4 = inlined_call_operand.vmem [shape: f32[2,8,128], index: 4, kind: output, shape index: {1}]
  %5 = xla_tuple %s3, %s4
  %s6 = sld [smem:[#allocation0]]
  $region53: #{_forward_impl.1} parent=0
    _
  %s8 = ssub.s32 1, %s6
  %s9 = scalar_select 0, %s8, %s6
  loop: start=0, step=1, limit=4
  $region2: #{_forward_impl.1} parent=0 // loop_pre_header
    _
  $region3: #{_forward_impl.1} parent=0 // loop_header
    %s11 = sphi 0, %s15
    %p12 = scmp.ge.s32.totalorder %s11, 4
    %s18 = sphi 0, %s30
    %s19 = sphi 0, %s26
    %s20 = sphi 0, %s18
    %s21 = sphi 0, %s19
    %s22 = sphi 0, %s20
    %s23 = sphi 0, %s21
    %s35 = sphi 0, %s37
    %s38 = sphi 0, %s35
    %s39 = sphi 0, %s38
    %s55 = sphi 0, %s39
    %s59 = sphi 0, %s59
    %s61 = sphi 0, %s59
    %s62 = sphi 0, %s61
    %s76 = sphi 0, %s62
    %s80 = sphi 0, %s80
    %s82 = sphi 0, %s80
    %s83 = sphi 0, %s82
    %s97 = sphi 0, %s83
    %s105 = sphi 0, %s107
    %s108 = sphi 0, %s105
    %s109 = sphi 0, %s108
    %s125 = sphi 0, %s109
    %s133 = sphi 0, %s135
    %s136 = sphi 0, %s133
    %s137 = sphi 0, %s136
    %s153 = sphi 0, %s137
  $region4: #{_forward_impl.1} parent=0 // loop_header_branch
    %14 = sbr.rel (%p12) target = $region8
  $region5: #{_forward_impl.1} parent=0 // loop_body
    %s16 = ssub.s32 %s11, 1
    %s17 = ssub.s32 %s11, 2
    %s24 = sadd.s32 1, %s19
    %p25 = scmp.ge.s32.totalorder %s24, 1
    %s26 = scalar_select %p25, 0, %s24
    %s27 = sadd.s32 1, %s18
    %s28 = scalar_select %p25, %s27, %s18
    %p29 = scmp.ge.s32.totalorder %s28, 2
    %s30 = scalar_select %p29, 0, %s28
    %s31 = ssub.s32 %s18, %s30
    %s32 = ssub.s32 %s19, %s26
    %s33 = sor.u32 %s31, %s32
    %p34 = scmp.eq.s32.totalorder %s33, 0
    %s36 = sadd.s32 %s35, 1
    %s37 = scalar_select %p34, %s35, %s36
    %p40 = pneg %p34
    %p41 = scmp.eq.s32.totalorder %s11, 1
    %p42 = por %p40, %p41
    %p43 = scmp.ne.s32.totalorder %s35, %s38
    %p44 = scmp.eq.s32.totalorder %s11, 0
    %p45 = por %p43, %p44
    %p46 = scmp.ne.s32.totalorder %s35, %s38
    %p47 = scmp.eq.s32.totalorder %s16, 1
    %p48 = por %p46, %p47
    %p49 = scmp.ne.s32.totalorder %s38, %s39
    %p50 = scmp.eq.s32.totalorder %s16, 0
    %p51 = por %p49, %p50
    %p52 = scmp.ne.s32.totalorder %s38, %s39
    %p53 = scmp.eq.s32.totalorder %s17, 1
    %p54 = por %p52, %p53
    %p56 = scmp.ne.s32.totalorder %s39, %s55
    %p57 = scmp.eq.s32.totalorder %s17, 0
    %p58 = por %p56, %p57
    %s60 = sadd.s32 %s59, 1
    %p63 = scmp.eq.s32.totalorder %s11, 1
    %p64 = scmp.ne.s32.totalorder %s59, %s61
    %p65 = scmp.eq.s32.totalorder %s11, 0
    %p66 = por %p64, %p65
    %p67 = scmp.ne.s32.totalorder %s59, %s61
    %p68 = scmp.eq.s32.totalorder %s16, 1
    %p69 = por %p67, %p68
    %p70 = scmp.ne.s32.totalorder %s61, %s62
    %p71 = scmp.eq.s32.totalorder %s16, 0
    %p72 = por %p70, %p71
    %p73 = scmp.ne.s32.totalorder %s61, %s62
    %p74 = scmp.eq.s32.totalorder %s17, 1
    %p75 = por %p73, %p74
    %p77 = scmp.ne.s32.totalorder %s62, %s76
    %p78 = scmp.eq.s32.totalorder %s17, 0
    %p79 = por %p77, %p78
    %s81 = sadd.s32 %s80, 1
    %p84 = scmp.eq.s32.totalorder %s11, 1
    %p85 = scmp.ne.s32.totalorder %s80, %s82
    %p86 = scmp.eq.s32.totalorder %s11, 0
    %p87 = por %p85, %p86
    %p88 = scmp.ne.s32.totalorder %s80, %s82
    %p89 = scmp.eq.s32.totalorder %s16, 1
    %p90 = por %p88, %p89
    %p91 = scmp.ne.s32.totalorder %s82, %s83
    %p92 = scmp.eq.s32.totalorder %s16, 0
    %p93 = por %p91, %p92
    %p94 = scmp.ne.s32.totalorder %s82, %s83
    %p95 = scmp.eq.s32.totalorder %s17, 1
    %p96 = por %p94, %p95
    %p98 = scmp.ne.s32.totalorder %s83, %s97
    %p99 = scmp.eq.s32.totalorder %s17, 0
    %p100 = por %p98, %p99
    %s101 = ssub.s32 %s18, %s30
    %s102 = ssub.s32 %s19, %s26
    %s103 = sor.u32 %s101, %s102
    %p104 = scmp.eq.s32.totalorder %s103, 0
    %s106 = sadd.s32 %s105, 1
    %s107 = scalar_select %p104, %s105, %s106
    %p110 = pneg %p104
    %p111 = scmp.eq.s32.totalorder %s11, 1
    %p112 = por %p110, %p111
    %p113 = scmp.ne.s32.totalorder %s105, %s108
    %p114 = scmp.eq.s32.totalorder %s11, 0
    %p115 = por %p113, %p114
    %p116 = scmp.ne.s32.totalorder %s105, %s108
    %p117 = scmp.eq.s32.totalorder %s16, 1
    %p118 = por %p116, %p117
    %p119 = scmp.ne.s32.totalorder %s108, %s109
    %p120 = scmp.eq.s32.totalorder %s16, 0
    %p121 = por %p119, %p120
    %p122 = scmp.ne.s32.totalorder %s108, %s109
    %p123 = scmp.eq.s32.totalorder %s17, 1
    %p124 = por %p122, %p123
    %p126 = scmp.ne.s32.totalorder %s109, %s125
    %p127 = scmp.eq.s32.totalorder %s17, 0
    %p128 = por %p126, %p127
    %s129 = ssub.s32 %s18, %s30
    %s130 = ssub.s32 %s19, %s26
    %s131 = sor.u32 %s129, %s130
    %p132 = scmp.eq.s32.totalorder %s131, 0
    %s134 = sadd.s32 %s133, 1
    %s135 = scalar_select %p132, %s133, %s134
    %p138 = pneg %p132
    %p139 = scmp.eq.s32.totalorder %s11, 1
    %p140 = por %p138, %p139
    %p141 = scmp.ne.s32.totalorder %s133, %s136
    %p142 = scmp.eq.s32.totalorder %s11, 0
    %p143 = por %p141, %p142
    %p144 = scmp.ne.s32.totalorder %s133, %s136
    %p145 = scmp.eq.s32.totalorder %s16, 1
    %p146 = por %p144, %p145
    %p147 = scmp.ne.s32.totalorder %s136, %s137
    %p148 = scmp.eq.s32.totalorder %s16, 0
    %p149 = por %p147, %p148
    %p150 = scmp.ne.s32.totalorder %s136, %s137
    %p151 = scmp.eq.s32.totalorder %s17, 1
    %p152 = por %p150, %p151
    %p154 = scmp.ne.s32.totalorder %s137, %s153
    %p155 = scmp.eq.s32.totalorder %s17, 0
    %p156 = por %p154, %p155
    %p157 = scmp.le.s32.totalorder 1, %s11
    %p158 = scmp.lt.s32.totalorder %s11, 3
    %p159 = pnand %p157, %p158
    %p160 = pneg %p159
    // Predicated region
    $region9: #{_forward_impl.1} parent=5 // pred_check
      _
    $region10: #{_forward_impl.1} parent=5 // pred_check_branch
      %162 = sbr.rel (%p159) target = $region12
    $region11: #{_forward_impl.1} parent=5 // pred_region
      %s163 = ssub.s32 %s11, 1
      // Predicated region
      $region13: #{_forward_impl.1} parent=11 // pred_check
        %p164 = pneg %p72
      $region14: #{_forward_impl.1} parent=11 // pred_check_branch
        %166 = sbr.rel (%p164) target = $region16
      $region15: #{_forward_impl.1} parent=11 // pred_region
        _
      $region16: #{_forward_impl.1} parent=11 // pred_fallthru
        _
      // Predicated region
      $region17: #{_forward_impl.1} parent=11 // pred_check
        %p167 = pneg %p93
      $region18: #{_forward_impl.1} parent=11 // pred_check_branch
        %169 = sbr.rel (%p167) target = $region20
      $region19: #{_forward_impl.1} parent=11 // pred_region
        _
      $region20: #{_forward_impl.1} parent=11 // pred_fallthru
        _
    $region12: #{_forward_impl.1} parent=5 // pred_fallthru
      _
    %p170 = scmp.lt.s32.totalorder %s11, 2
    // Predicated region
    $region21: #{_forward_impl.1} parent=5 // pred_check
      %p171 = pneg %p170
    $region22: #{_forward_impl.1} parent=5 // pred_check_branch
      %173 = sbr.rel (%p171) target = $region24
    $region23: #{_forward_impl.1} parent=5 // pred_region
      // Predicated region
      $region25: #{_forward_impl.1} parent=23 // pred_check
        %p174 = pneg %p45
      $region26: #{_forward_impl.1} parent=23 // pred_check_branch
        %176 = sbr.rel (%p174) target = $region28
      $region27: #{_forward_impl.1} parent=23 // pred_region
        %p177 = scmp.lt.s32.totalorder %s18, 1
        %s178 = scalar_select %p177, %s18, 1
        %p179 = scmp.lt.s32.totalorder %s19, 0
        %s180 = scalar_select %p179, %s19, 0
        %s181 = smul.addr %s180, 6
        %s182 = smul.addr %s178, 6
        %s183 = sadd.s32 %s181, %s182
        %s184 = smul.addr %s183, 4
        %s185 = scalar_lea.vmem %s0, %s184
      $region28: #{_forward_impl.1} parent=23 // pred_fallthru
        _
    $region24: #{_forward_impl.1} parent=5 // pred_fallthru
      _
    %p186 = scmp.le.s32.totalorder 1, %s11
    %p187 = scmp.lt.s32.totalorder %s11, 3
    %p188 = pnand %p186, %p187
    %p189 = pneg %p188
    // Predicated region
    $region29: #{_forward_impl.1} parent=5 // pred_check
      _
    $region30: #{_forward_impl.1} parent=5 // pred_check_branch
      %191 = sbr.rel (%p188) target = $region32
    $region31: #{_forward_impl.1} parent=5 // pred_region
      %s192 = ssub.s32 %s11, 1
      %p193 = scmp.lt.s32.totalorder %s20, 1
      %s194 = scalar_select %p193, %s20, 1
      %p195 = scmp.lt.s32.totalorder %s21, 0
      %s196 = scalar_select %p195, %s21, 0
      %s197 = smul.addr %s196, 6
      %s198 = smul.addr %s194, 6
      %s199 = sadd.s32 %s197, %s198
      %s200 = smul.addr %s199, 4
      %s201 = scalar_lea.vmem %s0, %s200
      %p202 = pneg %p51
      %p203 = pneg %p48
      %p204 = pneg %p72
      %p205 = pneg %p69
      %p206 = pneg %p93
      %p207 = pneg %p90
      %p208 = pneg %p121
      %p209 = pneg %p118
      %s210 = smul.u32 2, %s21
      %p211 = scmp.lt.s32.totalorder %s20, 1
      %s212 = scalar_select %p211, %s20, 1
      %p213 = scmp.lt.s32.totalorder %s210, 1
      %s214 = scalar_select %p213, %s210, 1
      %s215 = smul.addr %s212, 2
      %s216 = sadd.s32 %s214, %s215
      %s217 = smul.addr %s216, 8
      %s218 = scalar_lea.vmem %s3, %s217
      %p219 = pneg %p149
      %p220 = pneg %p146
      %p221 = scmp.lt.s32.totalorder %s20, 1
      %s222 = scalar_select %p221, %s20, 1
      %p223 = scmp.lt.s32.totalorder %s21, 0
      %s224 = scalar_select %p223, %s21, 0
      %s225 = sadd.s32 %s224, %s222
      %s226 = smul.addr %s225, 8
      %s227 = scalar_lea.vmem %s4, %s226
      %p228 = scmp.lt.s32.totalorder %s20, 1
      %s229 = scalar_select %p228, %s20, 1
      %p230 = scmp.lt.s32.totalorder %s21, 0
      %s231 = scalar_select %p230, %s21, 0
      %s232 = smul.addr %s231, 6
      %s233 = smul.addr %s229, 6
      %s234 = sadd.s32 %s232, %s233
      %s235 = smul.addr %s234, 4
      %s236 = scalar_lea.vmem %s0, %s235
      %s237 = smul.u32 2, %s21
      %p238 = scmp.lt.s32.totalorder %s20, 1
      %s239 = scalar_select %p238, %s20, 1
      %p240 = scmp.lt.s32.totalorder %s237, 1
      %s241 = scalar_select %p240, %s237, 1
      %s242 = smul.addr %s239, 2
      %s243 = sadd.s32 %s241, %s242
      %s244 = smul.addr %s243, 8
      %s245 = scalar_lea.vmem %s3, %s244
      %s246 = smul.u32 2, %s21
      %p247 = scmp.lt.s32.totalorder %s20, 1
      %s248 = scalar_select %p247, %s20, 1
      %p249 = scmp.lt.s32.totalorder %s21, 0
      %s250 = scalar_select %p249, %s21, 0
      %s251 = sadd.s32 %s250, %s248
      %s252 = smul.addr %s251, 8
      %s253 = scalar_lea.vmem %s4, %s252
      %v255 = vld [vmem:[%s236] sm:$0xff]
      %v256 = vld [vmem:[%s236 + $0x8] sm:$0xff]
      %v257 = vld [vmem:[%s1] sm:$0xff]
      %v258 = vld [vmem:[%s1 + $0x8] sm:$0xff]
      %v259 = vld [vmem:[%s1 + $0x10] sm:$0xff]
      %v260 = vld [vmem:[%s1 + $0x18] sm:$0xff]
      %v261 = vld [vmem:[%s1 + $0x20] sm:$0xff]
      %v262 = vld [vmem:[%s1 + $0x28] sm:$0xff]
      %v263 = vld [vmem:[%s1 + $0x30] sm:$0xff]
      %v264 = vld [vmem:[%s1 + $0x38] sm:$0xff]
      %v265 = vld [vmem:[%s1 + $0x40] sm:$0xff]
      %v266 = vld [vmem:[%s1 + $0x48] sm:$0xff]
      %v267 = vld [vmem:[%s1 + $0x50] sm:$0xff]
      %v268 = vld [vmem:[%s1 + $0x58] sm:$0xff]
      %v269 = vld [vmem:[%s1 + $0x60] sm:$0xff]
      %v270 = vld [vmem:[%s1 + $0x68] sm:$0xff]
      %v271 = vld [vmem:[%s1 + $0x70] sm:$0xff]
      %v272 = vld [vmem:[%s1 + $0x78] sm:$0xff]
      %v273 = vld [vmem:[%s1 + $0x80] sm:$0xff]
      %v274 = vld [vmem:[%s1 + $0x88] sm:$0xff]
      %v275 = vld [vmem:[%s1 + $0x90] sm:$0xff]
      %v276 = vld [vmem:[%s1 + $0x98] sm:$0xff]
      %v277 = vld [vmem:[%s1 + $0xa0] sm:$0xff]
      %v278 = vld [vmem:[%s1 + $0xa8] sm:$0xff]
      %v279 = vld [vmem:[%s1 + $0xb0] sm:$0xff]
      %v280 = vld [vmem:[%s1 + $0xb8] sm:$0xff]
      %v281 = vld [vmem:[%s1 + $0xc0] sm:$0xff]
      %v282 = vld [vmem:[%s1 + $0xc8] sm:$0xff]
      %v283 = vld [vmem:[%s1 + $0xd0] sm:$0xff]
      %v284 = vld [vmem:[%s1 + $0xd8] sm:$0xff]
      %v285 = vld [vmem:[%s1 + $0xe0] sm:$0xff]
      %v286 = vld [vmem:[%s1 + $0xe8] sm:$0xff]
      %v287 = vld [vmem:[%s1 + $0xf0] sm:$0xff]
      %v288 = vld [vmem:[%s1 + $0xf8] sm:$0xff]
      %v289 = vld [vmem:[%s1 + $0x100] sm:$0xff]
      %v290 = vld [vmem:[%s1 + $0x108] sm:$0xff]
      %v291 = vld [vmem:[%s1 + $0x110] sm:$0xff]
      %v292 = vld [vmem:[%s1 + $0x118] sm:$0xff]
      %v293 = vld [vmem:[%s1 + $0x120] sm:$0xff]
      %v294 = vld [vmem:[%s1 + $0x128] sm:$0xff]
      %v295 = vld [vmem:[%s1 + $0x130] sm:$0xff]
      %v296 = vld [vmem:[%s1 + $0x138] sm:$0xff]
      %v297 = vld [vmem:[%s236 + $0x10] sm:$0x11]
      %v298 = vld [vmem:[%s1 + $0x140] sm:$0xff]
      %v299 = vld [vmem:[%s1 + $0x148] sm:$0xff]
      %v300 = vld [vmem:[%s1 + $0x150] sm:$0xff]
      %v301 = vld [vmem:[%s1 + $0x158] sm:$0xff]
      %v302 = vld [vmem:[%s1 + $0x160] sm:$0xff]
      %v303 = vld [vmem:[%s1 + $0x168] sm:$0xff]
      %v304 = vld [vmem:[%s1 + $0x170] sm:$0xff]
      %v305 = vld [vmem:[%s1 + $0x178] sm:$0xff]
      %v306 = vld [vmem:[%s1 + $0x180] sm:$0xff]
      %v307 = vld [vmem:[%s1 + $0x188] sm:$0xff]
      %v308 = vld [vmem:[%s1 + $0x190] sm:$0xff]
      %v309 = vld [vmem:[%s1 + $0x198] sm:$0xff]
      %v310 = vld [vmem:[%s1 + $0x1a0] sm:$0xff]
      %v311 = vld [vmem:[%s1 + $0x1a8] sm:$0xff]
      %v312 = vld [vmem:[%s1 + $0x1b0] sm:$0xff]
      %v313 = vld [vmem:[%s1 + $0x1b8] sm:$0xff]
      %v314 = vld [vmem:[%s1 + $0x1c0] sm:$0xff]
      %v315 = vld [vmem:[%s1 + $0x1c8] sm:$0xff]
      %v316 = vld [vmem:[%s1 + $0x1d0] sm:$0xff]
      %v317 = vld [vmem:[%s1 + $0x1d8] sm:$0xff]
      %v318 = vld [vmem:[%s1 + $0x1e0] sm:$0xff]
      %v319 = vld [vmem:[%s1 + $0x1e8] sm:$0xff]
      %v320 = vld [vmem:[%s1 + $0x1f0] sm:$0xff]
      %v321 = vld [vmem:[%s1 + $0x1f8] sm:$0xff]
      %v322 = vld [vmem:[%s1 + $0x200] sm:$0xff]
      %v323 = vld [vmem:[%s1 + $0x208] sm:$0xff]
      %v324 = vld [vmem:[%s1 + $0x210] sm:$0xff]
      %v325 = vld [vmem:[%s1 + $0x218] sm:$0xff]
      %v326 = vld [vmem:[%s1 + $0x220] sm:$0xff]
      %v327 = vld [vmem:[%s1 + $0x228] sm:$0xff]
      %v328 = vld [vmem:[%s1 + $0x230] sm:$0xff]
      %v329 = vld [vmem:[%s1 + $0x238] sm:$0xff]
      %v330 = vld [vmem:[%s1 + $0x240] sm:$0xff]
      %v331 = vld [vmem:[%s1 + $0x248] sm:$0xff]
      %v332 = vld [vmem:[%s1 + $0x250] sm:$0xff]
      %v333 = vld [vmem:[%s1 + $0x258] sm:$0xff]
      %v334 = vld [vmem:[%s1 + $0x260] sm:$0xff]
      %v335 = vld [vmem:[%s1 + $0x268] sm:$0xff]
      %v336 = vld [vmem:[%s1 + $0x270] sm:$0xff]
      %v337 = vld [vmem:[%s1 + $0x278] sm:$0xff]
      %v341 = vunpack.c.l.b16 %v255
      %v342 = vunpack.c.h.b16 %v255
      %v343 = vunpack.c.l.b16 %v256
      %v344 = vunpack.c.h.b16 %v256
      %v345 = vunpack.c.l.b16 %v297
      %v346 = vunpack.c.h.b16 %v297
      %v347 = vpack.c.b16 %v343, %v341
      %v348 = vpack.c.b16 %v344, %v342
      %v349 = vpack.c.b16 %v345, %v345
      %v350 = vpack.c.b16 %v346, %v346
      %vm351 = vsmask.f32 7424
      %v353 = vshrl.u32 %v347, 16
      %v355 = vshll.u32 %v347, 16
      %v357 = vrot.slane %v355, 1
      %v358 = vor.u32 %v353, %v357
      %v360 = vshll.u32 %v349, 16
      %v362 = vrot.slane %v360, 1
      %v363 = vsel %vm351, %v358, %v362
      %v365 = vshrl.u32 %v348, 16
      %v367 = vshll.u32 %v348, 16
      %v369 = vrot.slane %v367, 1
      %v370 = vor.u32 %v365, %v369
      %v372 = vshll.u32 %v350, 16
      %v374 = vrot.slane %v372, 1
      %v375 = vsel %vm351, %v370, %v374
      %v417 = vunpack.c.l.b16 %v298
      %v418 = vunpack.c.h.b16 %v298
      %v419 = vunpack.c.l.b16 %v299
      %v420 = vunpack.c.h.b16 %v299
      %v421 = vunpack.c.l.b16 %v300
      %v422 = vunpack.c.h.b16 %v300
      %v423 = vunpack.c.l.b16 %v301
      %v424 = vunpack.c.h.b16 %v301
      %v425 = vunpack.c.l.b16 %v302
      %v426 = vunpack.c.h.b16 %v302
      %v427 = vunpack.c.l.b16 %v303
      %v428 = vunpack.c.h.b16 %v303
      %v429 = vunpack.c.l.b16 %v304
      %v430 = vunpack.c.h.b16 %v304
      %v431 = vunpack.c.l.b16 %v305
      %v432 = vunpack.c.h.b16 %v305
      %v433 = vunpack.c.l.b16 %v306
      %v434 = vunpack.c.h.b16 %v306
      %v435 = vunpack.c.l.b16 %v307
      %v436 = vunpack.c.h.b16 %v307
      %v437 = vunpack.c.l.b16 %v308
      %v438 = vunpack.c.h.b16 %v308
      %v439 = vunpack.c.l.b16 %v309
      %v440 = vunpack.c.h.b16 %v309
      %v441 = vunpack.c.l.b16 %v310
      %v442 = vunpack.c.h.b16 %v310
      %v443 = vunpack.c.l.b16 %v311
      %v444 = vunpack.c.h.b16 %v311
      %v445 = vunpack.c.l.b16 %v312
      %v446 = vunpack.c.h.b16 %v312
      %v447 = vunpack.c.l.b16 %v313
      %v448 = vunpack.c.h.b16 %v313
      %v449 = vunpack.c.l.b16 %v314
      %v450 = vunpack.c.h.b16 %v314
      %v451 = vunpack.c.l.b16 %v315
      %v452 = vunpack.c.h.b16 %v315
      %v453 = vunpack.c.l.b16 %v316
      %v454 = vunpack.c.h.b16 %v316
      %v455 = vunpack.c.l.b16 %v317
      %v456 = vunpack.c.h.b16 %v317
      %v457 = vunpack.c.l.b16 %v318
      %v458 = vunpack.c.h.b16 %v318
      %v459 = vunpack.c.l.b16 %v319
      %v460 = vunpack.c.h.b16 %v319
      %v461 = vunpack.c.l.b16 %v320
      %v462 = vunpack.c.h.b16 %v320
      %v463 = vunpack.c.l.b16 %v321
      %v464 = vunpack.c.h.b16 %v321
      %v465 = vunpack.c.l.b16 %v322
      %v466 = vunpack.c.h.b16 %v322
      %v467 = vunpack.c.l.b16 %v323
      %v468 = vunpack.c.h.b16 %v323
      %v469 = vunpack.c.l.b16 %v324
      %v470 = vunpack.c.h.b16 %v324
      %v471 = vunpack.c.l.b16 %v325
      %v472 = vunpack.c.h.b16 %v325
      %v473 = vunpack.c.l.b16 %v326
      %v474 = vunpack.c.h.b16 %v326
      %v475 = vunpack.c.l.b16 %v327
      %v476 = vunpack.c.h.b16 %v327
      %v477 = vunpack.c.l.b16 %v328
      %v478 = vunpack.c.h.b16 %v328
      %v479 = vunpack.c.l.b16 %v329
      %v480 = vunpack.c.h.b16 %v329
      %v481 = vunpack.c.l.b16 %v330
      %v482 = vunpack.c.h.b16 %v330
      %v483 = vunpack.c.l.b16 %v331
      %v484 = vunpack.c.h.b16 %v331
      %v485 = vunpack.c.l.b16 %v332
      %v486 = vunpack.c.h.b16 %v332
      %v487 = vunpack.c.l.b16 %v333
      %v488 = vunpack.c.h.b16 %v333
      %v489 = vunpack.c.l.b16 %v334
      %v490 = vunpack.c.h.b16 %v334
      %v491 = vunpack.c.l.b16 %v335
      %v492 = vunpack.c.h.b16 %v335
      %v493 = vunpack.c.l.b16 %v336
      %v494 = vunpack.c.h.b16 %v336
      %v495 = vunpack.c.l.b16 %v337
      %v496 = vunpack.c.h.b16 %v337
      %v497 = vpack.c.b16 %v421, %v417
      %v498 = vpack.c.b16 %v422, %v418
      %v499 = vpack.c.b16 %v423, %v419
      %v500 = vpack.c.b16 %v424, %v420
      %v501 = vpack.c.b16 %v429, %v425
      %v502 = vpack.c.b16 %v430, %v426
      %v503 = vpack.c.b16 %v431, %v427
      %v504 = vpack.c.b16 %v432, %v428
      %v505 = vpack.c.b16 %v437, %v433
      %v506 = vpack.c.b16 %v438, %v434
      %v507 = vpack.c.b16 %v439, %v435
      %v508 = vpack.c.b16 %v440, %v436
      %v509 = vpack.c.b16 %v445, %v441
      %v510 = vpack.c.b16 %v446, %v442
      %v511 = vpack.c.b16 %v447, %v443
      %v512 = vpack.c.b16 %v448, %v444
      %v513 = vpack.c.b16 %v453, %v449
      %v514 = vpack.c.b16 %v454, %v450
      %v515 = vpack.c.b16 %v455, %v451
      %v516 = vpack.c.b16 %v456, %v452
      %v517 = vpack.c.b16 %v461, %v457
      %v518 = vpack.c.b16 %v462, %v458
      %v519 = vpack.c.b16 %v463, %v459
      %v520 = vpack.c.b16 %v464, %v460
      %v521 = vpack.c.b16 %v469, %v465
      %v522 = vpack.c.b16 %v470, %v466
      %v523 = vpack.c.b16 %v471, %v467
      %v524 = vpack.c.b16 %v472, %v468
      %v525 = vpack.c.b16 %v477, %v473
      %v526 = vpack.c.b16 %v478, %v474
      %v527 = vpack.c.b16 %v479, %v475
      %v528 = vpack.c.b16 %v480, %v476
      %v529 = vpack.c.b16 %v485, %v481
      %v530 = vpack.c.b16 %v486, %v482
      %v531 = vpack.c.b16 %v487, %v483
      %v532 = vpack.c.b16 %v488, %v484
      %v533 = vpack.c.b16 %v493, %v489
      %v534 = vpack.c.b16 %v494, %v490
      %v535 = vpack.c.b16 %v495, %v491
      %v536 = vpack.c.b16 %v496, %v492
      %vm577 = vcmask 261120
      %v579 = vsel %vm577, %v375, 0
      %581 = vmatprep.subr.bf16.mxu0 %v498
      %582 = vmatpush1.bf16.msra.mxu0 %v497
      %583 = vmatprep.subr.bf16.mxu0 %v502
      %584 = vmatpush1.bf16.msra.mxu0 %v501
      %585 = vmatprep.subr.bf16.mxu0 %v506
      %586 = vmatpush1.bf16.msra.mxu0 %v505
      %587 = vmatprep.subr.bf16.mxu0 %v510
      %588 = vmatpush1.bf16.msra.mxu0 %v509
      %589 = vmatprep.subr.bf16.mxu0 %v514
      %590 = vmatpush1.bf16.msra.mxu0 %v513
      %591 = vmatprep.subr.bf16.mxu0 %v518
      %592 = vmatpush1.bf16.msra.mxu0 %v517
      %593 = vmatprep.subr.bf16.mxu0 %v522
      %594 = vmatpush1.bf16.msra.mxu0 %v521
      %595 = vmatprep.subr.bf16.mxu0 %v526
      %596 = vmatpush1.bf16.msra.mxu0 %v525
      %597 = vmatprep.subr.bf16.mxu0 %v530
      %598 = vmatpush1.bf16.msra.mxu0 %v529
      %599 = vmatprep.subr.bf16.mxu0 %v534
      %600 = vmatpush1.bf16.msra.mxu0 %v533
      %601 = vmatprep.subr.bf16.mxu0 0
      %602 = vmatpush1.bf16.msra.mxu0 0
      %603 = vmatprep.subr.bf16.mxu0 0
      %604 = vmatpush1.bf16.msra.mxu0 0
      %605 = vmatprep.subr.bf16.mxu0 0
      %606 = vmatpush1.bf16.msra.mxu0 0
      %607 = vmatprep.subr.bf16.mxu0 0
      %608 = vmatpush1.bf16.msra.mxu0 0
      %609 = vmatprep.subr.bf16.mxu0 0
      %610 = vmatpush1.bf16.msra.mxu0 0
      %611 = vmatprep.subr.bf16.mxu0 0
      %612 = vmatpush1.bf16.msra.mxu0 0
      %613 = vmatprep.mubr.bf16.mxu0 %v579
      %614 = vmatmul.mubr.bf16.gmra.mrb[0].mxu0 %v363
      %v615 = vpop.f32.mrb[0].mxu0
      %v616 = vadd.f32 0.0, %v615
      %v617 = vpop.f32.mrb[0].mxu0
      %v618 = vadd.f32 0.0, %v617
      %v619 = vpop.f32.mrb[0].mxu0
      %v620 = vadd.f32 0.0, %v619
      %v621 = vpop.f32.mrb[0].mxu0
      %v622 = vadd.f32 0.0, %v621
      %623 = vdwg.mxu0
      %624 = vmatprep.subr.bf16.mxu0 %v500
      %625 = vmatpush1.bf16.msra.mxu0 %v499
      %626 = vmatprep.subr.bf16.mxu0 %v504
      %627 = vmatpush1.bf16.msra.mxu0 %v503
      %628 = vmatprep.subr.bf16.mxu0 %v508
      %629 = vmatpush1.bf16.msra.mxu0 %v507
      %630 = vmatprep.subr.bf16.mxu0 %v512
      %631 = vmatpush1.bf16.msra.mxu0 %v511
      %632 = vmatprep.subr.bf16.mxu0 %v516
      %633 = vmatpush1.bf16.msra.mxu0 %v515
      %634 = vmatprep.subr.bf16.mxu0 %v520
      %635 = vmatpush1.bf16.msra.mxu0 %v519
      %636 = vmatprep.subr.bf16.mxu0 %v524
      %637 = vmatpush1.bf16.msra.mxu0 %v523
      %638 = vmatprep.subr.bf16.mxu0 %v528
      %639 = vmatpush1.bf16.msra.mxu0 %v527
      %640 = vmatprep.subr.bf16.mxu0 %v532
      %641 = vmatpush1.bf16.msra.mxu0 %v531
      %642 = vmatprep.subr.bf16.mxu0 %v536
      %643 = vmatpush1.bf16.msra.mxu0 %v535
      %644 = vmatprep.subr.bf16.mxu0 0
      %645 = vmatpush1.bf16.msra.mxu0 0
      %646 = vmatprep.subr.bf16.mxu0 0
      %647 = vmatpush1.bf16.msra.mxu0 0
      %648 = vmatprep.subr.bf16.mxu0 0
      %649 = vmatpush1.bf16.msra.mxu0 0
      %650 = vmatprep.subr.bf16.mxu0 0
      %651 = vmatpush1.bf16.msra.mxu0 0
      %652 = vmatprep.subr.bf16.mxu0 0
      %653 = vmatpush1.bf16.msra.mxu0 0
      %654 = vmatprep.subr.bf16.mxu0 0
      %655 = vmatpush1.bf16.msra.mxu0 0
      %656 = vmatprep.mubr.bf16.mxu0 %v579
      %657 = vmatmul.mubr.bf16.gmra.mrb[0].mxu0 %v363
      %v658 = vpop.f32.mrb[0].mxu0
      %v659 = vadd.f32 0.0, %v658
      %v660 = vpop.f32.mrb[0].mxu0
      %v661 = vadd.f32 0.0, %v660
      %v662 = vpop.f32.mrb[0].mxu0
      %v663 = vadd.f32 0.0, %v662
      %v664 = vpop.f32.mrb[0].mxu0
      %v665 = vadd.f32 0.0, %v664
      %666 = vdwg.mxu0
      %v708 = vunpack.c.l.b16 %v257
      %v709 = vunpack.c.h.b16 %v257
      %v710 = vunpack.c.l.b16 %v258
      %v711 = vunpack.c.h.b16 %v258
      %v712 = vunpack.c.l.b16 %v259
      %v713 = vunpack.c.h.b16 %v259
      %v714 = vunpack.c.l.b16 %v260
      %v715 = vunpack.c.h.b16 %v260
      %v716 = vunpack.c.l.b16 %v261
      %v717 = vunpack.c.h.b16 %v261
      %v718 = vunpack.c.l.b16 %v262
      %v719 = vunpack.c.h.b16 %v262
      %v720 = vunpack.c.l.b16 %v263
      %v721 = vunpack.c.h.b16 %v263
      %v722 = vunpack.c.l.b16 %v264
      %v723 = vunpack.c.h.b16 %v264
      %v724 = vunpack.c.l.b16 %v265
      %v725 = vunpack.c.h.b16 %v265
      %v726 = vunpack.c.l.b16 %v266
      %v727 = vunpack.c.h.b16 %v266
      %v728 = vunpack.c.l.b16 %v267
      %v729 = vunpack.c.h.b16 %v267
      %v730 = vunpack.c.l.b16 %v268
      %v731 = vunpack.c.h.b16 %v268
      %v732 = vunpack.c.l.b16 %v269
      %v733 = vunpack.c.h.b16 %v269
      %v734 = vunpack.c.l.b16 %v270
      %v735 = vunpack.c.h.b16 %v270
      %v736 = vunpack.c.l.b16 %v271
      %v737 = vunpack.c.h.b16 %v271
      %v738 = vunpack.c.l.b16 %v272
      %v739 = vunpack.c.h.b16 %v272
      %v740 = vunpack.c.l.b16 %v273
      %v741 = vunpack.c.h.b16 %v273
      %v742 = vunpack.c.l.b16 %v274
      %v743 = vunpack.c.h.b16 %v274
      %v744 = vunpack.c.l.b16 %v275
      %v745 = vunpack.c.h.b16 %v275
      %v746 = vunpack.c.l.b16 %v276
      %v747 = vunpack.c.h.b16 %v276
      %v748 = vunpack.c.l.b16 %v277
      %v749 = vunpack.c.h.b16 %v277
      %v750 = vunpack.c.l.b16 %v278
      %v751 = vunpack.c.h.b16 %v278
      %v752 = vunpack.c.l.b16 %v279
      %v753 = vunpack.c.h.b16 %v279
      %v754 = vunpack.c.l.b16 %v280
      %v755 = vunpack.c.h.b16 %v280
      %v756 = vunpack.c.l.b16 %v281
      %v757 = vunpack.c.h.b16 %v281
      %v758 = vunpack.c.l.b16 %v282
      %v759 = vunpack.c.h.b16 %v282
      %v760 = vunpack.c.l.b16 %v283
      %v761 = vunpack.c.h.b16 %v283
      %v762 = vunpack.c.l.b16 %v284
      %v763 = vunpack.c.h.b16 %v284
      %v764 = vunpack.c.l.b16 %v285
      %v765 = vunpack.c.h.b16 %v285
      %v766 = vunpack.c.l.b16 %v286
      %v767 = vunpack.c.h.b16 %v286
      %v768 = vunpack.c.l.b16 %v287
      %v769 = vunpack.c.h.b16 %v287
      %v770 = vunpack.c.l.b16 %v288
      %v771 = vunpack.c.h.b16 %v288
      %v772 = vunpack.c.l.b16 %v289
      %v773 = vunpack.c.h.b16 %v289
      %v774 = vunpack.c.l.b16 %v290
      %v775 = vunpack.c.h.b16 %v290
      %v776 = vunpack.c.l.b16 %v291
      %v777 = vunpack.c.h.b16 %v291
      %v778 = vunpack.c.l.b16 %v292
      %v779 = vunpack.c.h.b16 %v292
      %v780 = vunpack.c.l.b16 %v293
      %v781 = vunpack.c.h.b16 %v293
      %v782 = vunpack.c.l.b16 %v294
      %v783 = vunpack.c.h.b16 %v294
      %v784 = vunpack.c.l.b16 %v295
      %v785 = vunpack.c.h.b16 %v295
      %v786 = vunpack.c.l.b16 %v296
      %v787 = vunpack.c.h.b16 %v296
      %v788 = vpack.c.b16 %v712, %v708
      %v789 = vpack.c.b16 %v713, %v709
      %v790 = vpack.c.b16 %v714, %v710
      %v791 = vpack.c.b16 %v715, %v711
      %v792 = vpack.c.b16 %v720, %v716
      %v793 = vpack.c.b16 %v721, %v717
      %v794 = vpack.c.b16 %v722, %v718
      %v795 = vpack.c.b16 %v723, %v719
      %v796 = vpack.c.b16 %v728, %v724
      %v797 = vpack.c.b16 %v729, %v725
      %v798 = vpack.c.b16 %v730, %v726
      %v799 = vpack.c.b16 %v731, %v727
      %v800 = vpack.c.b16 %v736, %v732
      %v801 = vpack.c.b16 %v737, %v733
      %v802 = vpack.c.b16 %v738, %v734
      %v803 = vpack.c.b16 %v739, %v735
      %v804 = vpack.c.b16 %v744, %v740
      %v805 = vpack.c.b16 %v745, %v741
      %v806 = vpack.c.b16 %v746, %v742
      %v807 = vpack.c.b16 %v747, %v743
      %v808 = vpack.c.b16 %v752, %v748
      %v809 = vpack.c.b16 %v753, %v749
      %v810 = vpack.c.b16 %v754, %v750
      %v811 = vpack.c.b16 %v755, %v751
      %v812 = vpack.c.b16 %v760, %v756
      %v813 = vpack.c.b16 %v761, %v757
      %v814 = vpack.c.b16 %v762, %v758
      %v815 = vpack.c.b16 %v763, %v759
      %v816 = vpack.c.b16 %v768, %v764
      %v817 = vpack.c.b16 %v769, %v765
      %v818 = vpack.c.b16 %v770, %v766
      %v819 = vpack.c.b16 %v771, %v767
      %v820 = vpack.c.b16 %v776, %v772
      %v821 = vpack.c.b16 %v777, %v773
      %v822 = vpack.c.b16 %v778, %v774
      %v823 = vpack.c.b16 %v779, %v775
      %v824 = vpack.c.b16 %v784, %v780
      %v825 = vpack.c.b16 %v785, %v781
      %v826 = vpack.c.b16 %v786, %v782
      %v827 = vpack.c.b16 %v787, %v783
      %v868 = vsel %vm577, %v348, 0
      %870 = vmatprep.subr.bf16.mxu0 %v789
      %871 = vmatpush1.bf16.msra.mxu0 %v788
      %872 = vmatprep.subr.bf16.mxu0 %v793
      %873 = vmatpush1.bf16.msra.mxu0 %v792
      %874 = vmatprep.subr.bf16.mxu0 %v797
      %875 = vmatpush1.bf16.msra.mxu0 %v796
      %876 = vmatprep.subr.bf16.mxu0 %v801
      %877 = vmatpush1.bf16.msra.mxu0 %v800
      %878 = vmatprep.subr.bf16.mxu0 %v805
      %879 = vmatpush1.bf16.msra.mxu0 %v804
      %880 = vmatprep.subr.bf16.mxu0 %v809
      %881 = vmatpush1.bf16.msra.mxu0 %v808
      %882 = vmatprep.subr.bf16.mxu0 %v813
      %883 = vmatpush1.bf16.msra.mxu0 %v812
      %884 = vmatprep.subr.bf16.mxu0 %v817
      %885 = vmatpush1.bf16.msra.mxu0 %v816
      %886 = vmatprep.subr.bf16.mxu0 %v821
      %887 = vmatpush1.bf16.msra.mxu0 %v820
      %888 = vmatprep.subr.bf16.mxu0 %v825
      %889 = vmatpush1.bf16.msra.mxu0 %v824
      %890 = vmatprep.subr.bf16.mxu0 0
      %891 = vmatpush1.bf16.msra.mxu0 0
      %892 = vmatprep.subr.bf16.mxu0 0
      %893 = vmatpush1.bf16.msra.mxu0 0
      %894 = vmatprep.subr.bf16.mxu0 0
      %895 = vmatpush1.bf16.msra.mxu0 0
      %896 = vmatprep.subr.bf16.mxu0 0
      %897 = vmatpush1.bf16.msra.mxu0 0
      %898 = vmatprep.subr.bf16.mxu0 0
      %899 = vmatpush1.bf16.msra.mxu0 0
      %900 = vmatprep.subr.bf16.mxu0 0
      %901 = vmatpush1.bf16.msra.mxu0 0
      %902 = vmatprep.mubr.bf16.mxu0 %v868
      %903 = vmatmul.mubr.bf16.gmra.mrb[0].mxu0 %v347
      %v904 = vpop.f32.mrb[0].mxu0
      %v905 = vadd.f32 %v616, %v904
      %v906 = vpop.f32.mrb[0].mxu0
      %v907 = vadd.f32 %v618, %v906
      %v908 = vpop.f32.mrb[0].mxu0
      %v909 = vadd.f32 %v620, %v908
      %v910 = vpop.f32.mrb[0].mxu0
      %v911 = vadd.f32 %v622, %v910
      %912 = vdwg.mxu0
      %913 = vmatprep.subr.bf16.mxu0 %v791
      %914 = vmatpush1.bf16.msra.mxu0 %v790
      %915 = vmatprep.subr.bf16.mxu0 %v795
      %916 = vmatpush1.bf16.msra.mxu0 %v794
      %917 = vmatprep.subr.bf16.mxu0 %v799
      %918 = vmatpush1.bf16.msra.mxu0 %v798
      %919 = vmatprep.subr.bf16.mxu0 %v803
      %920 = vmatpush1.bf16.msra.mxu0 %v802
      %921 = vmatprep.subr.bf16.mxu0 %v807
      %922 = vmatpush1.bf16.msra.mxu0 %v806
      %923 = vmatprep.subr.bf16.mxu0 %v811
      %924 = vmatpush1.bf16.msra.mxu0 %v810
      %925 = vmatprep.subr.bf16.mxu0 %v815
      %926 = vmatpush1.bf16.msra.mxu0 %v814
      %927 = vmatprep.subr.bf16.mxu0 %v819
      %928 = vmatpush1.bf16.msra.mxu0 %v818
      %929 = vmatprep.subr.bf16.mxu0 %v823
      %930 = vmatpush1.bf16.msra.mxu0 %v822
      %931 = vmatprep.subr.bf16.mxu0 %v827
      %932 = vmatpush1.bf16.msra.mxu0 %v826
      %933 = vmatprep.subr.bf16.mxu0 0
      %934 = vmatpush1.bf16.msra.mxu0 0
      %935 = vmatprep.subr.bf16.mxu0 0
      %936 = vmatpush1.bf16.msra.mxu0 0
      %937 = vmatprep.subr.bf16.mxu0 0
      %938 = vmatpush1.bf16.msra.mxu0 0
      %939 = vmatprep.subr.bf16.mxu0 0
      %940 = vmatpush1.bf16.msra.mxu0 0
      %941 = vmatprep.subr.bf16.mxu0 0
      %942 = vmatpush1.bf16.msra.mxu0 0
      %943 = vmatprep.subr.bf16.mxu0 0
      %944 = vmatpush1.bf16.msra.mxu0 0
      %945 = vmatprep.mubr.bf16.mxu0 %v868
      %946 = vmatmul.mubr.bf16.gmra.mrb[0].mxu0 %v347
      %v947 = vpop.f32.mrb[0].mxu0
      %v948 = vadd.f32 %v659, %v947
      %v949 = vpop.f32.mrb[0].mxu0
      %v950 = vadd.f32 %v661, %v949
      %v951 = vpop.f32.mrb[0].mxu0
      %v952 = vadd.f32 %v663, %v951
      %v953 = vpop.f32.mrb[0].mxu0
      %v954 = vadd.f32 %v665, %v953
      %955 = vdwg.mxu0
      %v956 = vld [vmem:[%s236] sm:$0xe]
      %v957 = vld [vmem:[%s236 + $0x8] sm:$0xf]
      %v958 = vld [vmem:[%s236 + $0x10] sm:$0x1]
      %v959 = vld [vmem:[%s1 + $0x280] sm:$0xff]
      %v960 = vld [vmem:[%s1 + $0x288] sm:$0xff]
      %v961 = vld [vmem:[%s1 + $0x290] sm:$0xff]
      %v962 = vld [vmem:[%s1 + $0x298] sm:$0xff]
      %v963 = vld [vmem:[%s1 + $0x2a0] sm:$0xff]
      %v964 = vld [vmem:[%s1 + $0x2a8] sm:$0xff]
      %v965 = vld [vmem:[%s1 + $0x2b0] sm:$0xff]
      %v966 = vld [vmem:[%s1 + $0x2b8] sm:$0xff]
      %v967 = vld [vmem:[%s1 + $0x2c0] sm:$0xff]
      %v968 = vld [vmem:[%s1 + $0x2c8] sm:$0xff]
      %v969 = vld [vmem:[%s1 + $0x2d0] sm:$0xff]
      %v970 = vld [vmem:[%s1 + $0x2d8] sm:$0xff]
      %v971 = vld [vmem:[%s1 + $0x2e0] sm:$0xff]
      %v972 = vld [vmem:[%s1 + $0x2e8] sm:$0xff]
      %v973 = vld [vmem:[%s1 + $0x2f0] sm:$0xff]
      %v974 = vld [vmem:[%s1 + $0x2f8] sm:$0xff]
      %v975 = vld [vmem:[%s1 + $0x300] sm:$0xff]
      %v976 = vld [vmem:[%s1 + $0x308] sm:$0xff]
      %v977 = vld [vmem:[%s1 + $0x310] sm:$0xff]
      %v978 = vld [vmem:[%s1 + $0x318] sm:$0xff]
      %v982 = vunpack.c.l.b16 %v956
      %v983 = vunpack.c.l.b16 %v957
      %v984 = vunpack.c.l.b16 %v958
      %v985 = vpack.c.b16 %v983, %v982
      %v986 = vpack.c.b16 %v984, %v984
      %vm987 = vcmask 1046528
      %v988 = vrot.slane %v985, 1
      %v989 = vrot.slane %v986, 1
      %v990 = vsel %vm987, %v988, %v989
      %v1011 = vunpack.c.l.b16 %v959
      %v1012 = vunpack.c.h.b16 %v959
      %v1013 = vunpack.c.l.b16 %v960
      %v1014 = vunpack.c.h.b16 %v960
      %v1015 = vunpack.c.l.b16 %v961
      %v1016 = vunpack.c.h.b16 %v961
      %v1017 = vunpack.c.l.b16 %v962
      %v1018 = vunpack.c.h.b16 %v962
      %v1019 = vunpack.c.l.b16 %v963
      %v1020 = vunpack.c.h.b16 %v963
      %v1021 = vunpack.c.l.b16 %v964
      %v1022 = vunpack.c.h.b16 %v964
      %v1023 = vunpack.c.l.b16 %v965
      %v1024 = vunpack.c.h.b16 %v965
      %v1025 = vunpack.c.l.b16 %v966
      %v1026 = vunpack.c.h.b16 %v966
      %v1027 = vunpack.c.l.b16 %v967
      %v1028 = vunpack.c.h.b16 %v967
      %v1029 = vunpack.c.l.b16 %v968
      %v1030 = vunpack.c.h.b16 %v968
      %v1031 = vunpack.c.l.b16 %v969
      %v1032 = vunpack.c.h.b16 %v969
      %v1033 = vunpack.c.l.b16 %v970
      %v1034 = vunpack.c.h.b16 %v970
      %v1035 = vunpack.c.l.b16 %v971
      %v1036 = vunpack.c.h.b16 %v971
      %v1037 = vunpack.c.l.b16 %v972
      %v1038 = vunpack.c.h.b16 %v972
      %v1039 = vunpack.c.l.b16 %v973
      %v1040 = vunpack.c.h.b16 %v973
      %v1041 = vunpack.c.l.b16 %v974
      %v1042 = vunpack.c.h.b16 %v974
      %v1043 = vunpack.c.l.b16 %v975
      %v1044 = vunpack.c.h.b16 %v975
      %v1045 = vunpack.c.l.b16 %v976
      %v1046 = vunpack.c.h.b16 %v976
      %v1047 = vunpack.c.l.b16 %v977
      %v1048 = vunpack.c.h.b16 %v977
      %v1049 = vunpack.c.l.b16 %v978
      %v1050 = vunpack.c.h.b16 %v978
      %v1051 = vpack.c.b16 %v1015, %v1011
      %v1052 = vpack.c.b16 %v1016, %v1012
      %v1053 = vpack.c.b16 %v1017, %v1013
      %v1054 = vpack.c.b16 %v1018, %v1014
      %v1055 = vpack.c.b16 %v1023, %v1019
      %v1056 = vpack.c.b16 %v1024, %v1020
      %v1057 = vpack.c.b16 %v1025, %v1021
      %v1058 = vpack.c.b16 %v1026, %v1022
      %v1059 = vpack.c.b16 %v1031, %v1027
      %v1060 = vpack.c.b16 %v1032, %v1028
      %v1061 = vpack.c.b16 %v1033, %v1029
      %v1062 = vpack.c.b16 %v1034, %v1030
      %v1063 = vpack.c.b16 %v1039, %v1035
      %v1064 = vpack.c.b16 %v1040, %v1036
      %v1065 = vpack.c.b16 %v1041, %v1037
      %v1066 = vpack.c.b16 %v1042, %v1038
      %v1067 = vpack.c.b16 %v1047, %v1043
      %v1068 = vpack.c.b16 %v1048, %v1044
      %v1069 = vpack.c.b16 %v1049, %v1045
      %v1070 = vpack.c.b16 %v1050, %v1046
      %vm1091 = vcmask 654336
      %v1093 = vsel %vm1091, %v990, 0
      %1095 = vmatprep.subr.bf16.mxu0 %v1052
      %1096 = vmatpush1.bf16.msra.mxu0 %v1051
      %1097 = vmatprep.subr.bf16.mxu0 %v1056
      %1098 = vmatpush1.bf16.msra.mxu0 %v1055
      %1099 = vmatprep.subr.bf16.mxu0 %v1060
      %1100 = vmatpush1.bf16.msra.mxu0 %v1059
      %1101 = vmatprep.subr.bf16.mxu0 %v1064
      %1102 = vmatpush1.bf16.msra.mxu0 %v1063
      %1103 = vmatprep.subr.bf16.mxu0 %v1068
      %1104 = vmatpush1.bf16.msra.mxu0 %v1067
      %1105 = vmatprep.subr.bf16.mxu0 0
      %1106 = vmatpush1.bf16.msra.mxu0 0
      %1107 = vmatprep.subr.bf16.mxu0 0
      %1108 = vmatpush1.bf16.msra.mxu0 0
      %1109 = vmatprep.subr.bf16.mxu0 0
      %1110 = vmatpush1.bf16.msra.mxu0 0
      %1111 = vmatprep.subr.bf16.mxu0 0
      %1112 = vmatpush1.bf16.msra.mxu0 0
      %1113 = vmatprep.subr.bf16.mxu0 0
      %1114 = vmatpush1.bf16.msra.mxu0 0
      %1115 = vmatprep.subr.bf16.mxu0 0
      %1116 = vmatpush1.bf16.msra.mxu0 0
      %1117 = vmatprep.subr.bf16.mxu0 0
      %1118 = vmatpush1.bf16.msra.mxu0 0
      %1119 = vmatprep.subr.bf16.mxu0 0
      %1120 = vmatpush1.bf16.msra.mxu0 0
      %1121 = vmatprep.subr.bf16.mxu0 0
      %1122 = vmatpush1.bf16.msra.mxu0 0
      %1123 = vmatprep.subr.bf16.mxu0 0
      %1124 = vmatpush1.bf16.msra.mxu0 0
      %1125 = vmatprep.subr.bf16.mxu0 0
      %1126 = vmatpush1.bf16.msra.mxu0 0
      %1127 = vmatprep.mubr.bf16.mxu0 0
      %1128 = vmatmul.mubr.bf16.gmra.mrb[0].mxu0 %v1093
      %v1129 = vpop.f32.mrb[0].mxu0
      %v1130 = vadd.f32 0.0, %v1129
      %v1131 = vpop.f32.mrb[0].mxu0
      %v1132 = vadd.f32 0.0, %v1131
      %v1133 = vpop.f32.mrb[0].mxu0
      %v1134 = vadd.f32 0.0, %v1133
      %v1135 = vpop.f32.mrb[0].mxu0
      %v1136 = vadd.f32 0.0, %v1135
      %1137 = vdwg.mxu0
      %1138 = vmatprep.subr.bf16.mxu0 %v1054
      %1139 = vmatpush1.bf16.msra.mxu0 %v1053
      %1140 = vmatprep.subr.bf16.mxu0 %v1058
      %1141 = vmatpush1.bf16.msra.mxu0 %v1057
      %1142 = vmatprep.subr.bf16.mxu0 %v1062
      %1143 = vmatpush1.bf16.msra.mxu0 %v1061
      %1144 = vmatprep.subr.bf16.mxu0 %v1066
      %1145 = vmatpush1.bf16.msra.mxu0 %v1065
      %1146 = vmatprep.subr.bf16.mxu0 %v1070
      %1147 = vmatpush1.bf16.msra.mxu0 %v1069
      %1148 = vmatprep.subr.bf16.mxu0 0
      %1149 = vmatpush1.bf16.msra.mxu0 0
      %1150 = vmatprep.subr.bf16.mxu0 0
      %1151 = vmatpush1.bf16.msra.mxu0 0
      %1152 = vmatprep.subr.bf16.mxu0 0
      %1153 = vmatpush1.bf16.msra.mxu0 0
      %1154 = vmatprep.subr.bf16.mxu0 0
      %1155 = vmatpush1.bf16.msra.mxu0 0
      %1156 = vmatprep.subr.bf16.mxu0 0
      %1157 = vmatpush1.bf16.msra.mxu0 0
      %1158 = vmatprep.subr.bf16.mxu0 0
      %1159 = vmatpush1.bf16.msra.mxu0 0
      %1160 = vmatprep.subr.bf16.mxu0 0
      %1161 = vmatpush1.bf16.msra.mxu0 0
      %1162 = vmatprep.subr.bf16.mxu0 0
      %1163 = vmatpush1.bf16.msra.mxu0 0
      %1164 = vmatprep.subr.bf16.mxu0 0
      %1165 = vmatpush1.bf16.msra.mxu0 0
      %1166 = vmatprep.subr.bf16.mxu0 0
      %1167 = vmatpush1.bf16.msra.mxu0 0
      %1168 = vmatprep.subr.bf16.mxu0 0
      %1169 = vmatpush1.bf16.msra.mxu0 0
      %1170 = vmatprep.mubr.bf16.mxu0 0
      %1171 = vmatmul.mubr.bf16.gmra.mrb[0].mxu0 %v1093
      %v1172 = vpop.f32.mrb[0].mxu0
      %v1173 = vadd.f32 0.0, %v1172
      %v1174 = vpop.f32.mrb[0].mxu0
      %v1175 = vadd.f32 0.0, %v1174
      %v1176 = vpop.f32.mrb[0].mxu0
      %v1177 = vadd.f32 0.0, %v1176
      %v1178 = vpop.f32.mrb[0].mxu0
      %v1179 = vadd.f32 0.0, %v1178
      %1180 = vdwg.mxu0
      %v1181 = vadd.f32 %v905, %v1130
      %v1182 = vadd.f32 %v907, %v1132
      %v1183 = vadd.f32 %v948, %v1173
      %v1184 = vadd.f32 %v950, %v1175
      %v1185 = vadd.f32 %v909, %v1134
      %v1186 = vadd.f32 %v911, %v1136
      %v1187 = vadd.f32 %v952, %v1177
      %v1188 = vadd.f32 %v954, %v1179
      %v1189 = vmul.f32 %v1181, %v1181
      %v1190 = vmul.f32 %v1182, %v1182
      %v1191 = vmul.f32 %v1185, %v1185
      %v1192 = vmul.f32 %v1186, %v1186
      %v1193 = vmul.f32 %v1183, %v1183
      %v1194 = vmul.f32 %v1184, %v1184
      %v1195 = vmul.f32 %v1187, %v1187
      %v1196 = vmul.f32 %v1188, %v1188
      %v1197 = vadd.f32 %v1189, %v1193
      %v1198 = vadd.f32 %v1190, %v1194
      %v1199 = vadd.f32 %v1191, %v1195
      %v1200 = vadd.f32 %v1192, %v1196
      %v1201 = vpack.c.bf16 %v1199, %v1197
      %v1202 = vpack.c.bf16 %v1200, %v1198
      %v1203 = vld [vmem:[%s2] sm:$0xf]
      %v1204 = vld [vmem:[%s2 + $0x4] sm:$0xf]
      %v1205 = vld [vmem:[%s2 + $0x8] sm:$0xf]
      %v1206 = vld [vmem:[%s2 + $0xc] sm:$0xf]
      %v1207 = vld [vmem:[%s2 + $0x10] sm:$0xf]
      %v1208 = vld [vmem:[%s2 + $0x14] sm:$0xf]
      %v1209 = vld [vmem:[%s2 + $0x18] sm:$0xf]
      %v1210 = vld [vmem:[%s2 + $0x1c] sm:$0xf]
      %v1211 = vld [vmem:[%s2 + $0x20] sm:$0xf]
      %v1212 = vld [vmem:[%s2 + $0x24] sm:$0xf]
      %v1213 = vld [vmem:[%s2 + $0x28] sm:$0xf]
      %v1214 = vld [vmem:[%s2 + $0x2c] sm:$0xf]
      %v1215 = vld [vmem:[%s2 + $0x30] sm:$0xf]
      %v1216 = vld [vmem:[%s2 + $0x34] sm:$0xf]
      %v1217 = vld [vmem:[%s2 + $0x38] sm:$0xf]
      %v1218 = vld [vmem:[%s2 + $0x3c] sm:$0xf]
      %v1219 = vld [vmem:[%s2 + $0x40] sm:$0xf]
      %v1220 = vld [vmem:[%s2 + $0x44] sm:$0xf]
      %v1221 = vld [vmem:[%s2 + $0x48] sm:$0xf]
      %v1222 = vld [vmem:[%s2 + $0x4c] sm:$0xf]
      %v1223 = vld [vmem:[%s2 + $0x50] sm:$0xf]
      %v1224 = vld [vmem:[%s2 + $0x54] sm:$0xf]
      %v1225 = vld [vmem:[%s2 + $0x58] sm:$0xf]
      %v1226 = vld [vmem:[%s2 + $0x5c] sm:$0xf]
      %v1227 = vld [vmem:[%s2 + $0x60] sm:$0xf]
      %v1228 = vld [vmem:[%s2 + $0x64] sm:$0xf]
      %v1229 = vld [vmem:[%s2 + $0x68] sm:$0xf]
      %v1230 = vld [vmem:[%s2 + $0x6c] sm:$0xf]
      %v1231 = vld [vmem:[%s2 + $0x70] sm:$0xf]
      %v1232 = vld [vmem:[%s2 + $0x74] sm:$0xf]
      %v1233 = vld [vmem:[%s2 + $0x78] sm:$0xf]
      %v1234 = vld [vmem:[%s2 + $0x7c] sm:$0xf]
      %v1267 = vunpack.c.l.b16 %v1203
      %v1268 = vunpack.c.l.b16 %v1204
      %v1269 = vunpack.c.l.b16 %v1205
      %v1270 = vunpack.c.l.b16 %v1206
      %v1271 = vunpack.c.l.b16 %v1207
      %v1272 = vunpack.c.l.b16 %v1208
      %v1273 = vunpack.c.l.b16 %v1209
      %v1274 = vunpack.c.l.b16 %v1210
      %v1275 = vunpack.c.l.b16 %v1211
      %v1276 = vunpack.c.l.b16 %v1212
      %v1277 = vunpack.c.l.b16 %v1213
      %v1278 = vunpack.c.l.b16 %v1214
      %v1279 = vunpack.c.l.b16 %v1215
      %v1280 = vunpack.c.l.b16 %v1216
      %v1281 = vunpack.c.l.b16 %v1217
      %v1282 = vunpack.c.l.b16 %v1218
      %v1283 = vunpack.c.l.b16 %v1219
      %v1284 = vunpack.c.l.b16 %v1220
      %v1285 = vunpack.c.l.b16 %v1221
      %v1286 = vunpack.c.l.b16 %v1222
      %v1287 = vunpack.c.l.b16 %v1223
      %v1288 = vunpack.c.l.b16 %v1224
      %v1289 = vunpack.c.l.b16 %v1225
      %v1290 = vunpack.c.l.b16 %v1226
      %v1291 = vunpack.c.l.b16 %v1227
      %v1292 = vunpack.c.l.b16 %v1228
      %v1293 = vunpack.c.l.b16 %v1229
      %v1294 = vunpack.c.l.b16 %v1230
      %v1295 = vunpack.c.l.b16 %v1231
      %v1296 = vunpack.c.l.b16 %v1232
      %v1297 = vunpack.c.l.b16 %v1233
      %v1298 = vunpack.c.l.b16 %v1234
      %v1299 = vpack.c.b16 %v1268, %v1267
      %v1300 = vpack.c.b16 %v1270, %v1269
      %v1301 = vpack.c.b16 %v1272, %v1271
      %v1302 = vpack.c.b16 %v1274, %v1273
      %v1303 = vpack.c.b16 %v1276, %v1275
      %v1304 = vpack.c.b16 %v1278, %v1277
      %v1305 = vpack.c.b16 %v1280, %v1279
      %v1306 = vpack.c.b16 %v1282, %v1281
      %v1307 = vpack.c.b16 %v1284, %v1283
      %v1308 = vpack.c.b16 %v1286, %v1285
      %v1309 = vpack.c.b16 %v1288, %v1287
      %v1310 = vpack.c.b16 %v1290, %v1289
      %v1311 = vpack.c.b16 %v1292, %v1291
      %v1312 = vpack.c.b16 %v1294, %v1293
      %v1313 = vpack.c.b16 %v1296, %v1295
      %v1314 = vpack.c.b16 %v1298, %v1297
      %1331 = vmatprep.subr.bf16.mxu0 0
      %1332 = vmatpush1.bf16.msra.mxu0 %v1299
      %1333 = vmatprep.subr.bf16.mxu0 0
      %1334 = vmatpush1.bf16.msra.mxu0 %v1300
      %1335 = vmatprep.subr.bf16.mxu0 0
      %1336 = vmatpush1.bf16.msra.mxu0 %v1301
      %1337 = vmatprep.subr.bf16.mxu0 0
      %1338 = vmatpush1.bf16.msra.mxu0 %v1302
      %1339 = vmatprep.subr.bf16.mxu0 0
      %1340 = vmatpush1.bf16.msra.mxu0 %v1303
      %1341 = vmatprep.subr.bf16.mxu0 0
      %1342 = vmatpush1.bf16.msra.mxu0 %v1304
      %1343 = vmatprep.subr.bf16.mxu0 0
      %1344 = vmatpush1.bf16.msra.mxu0 %v1305
      %1345 = vmatprep.subr.bf16.mxu0 0
      %1346 = vmatpush1.bf16.msra.mxu0 %v1306
      %1347 = vmatprep.subr.bf16.mxu0 0
      %1348 = vmatpush1.bf16.msra.mxu0 %v1307
      %1349 = vmatprep.subr.bf16.mxu0 0
      %1350 = vmatpush1.bf16.msra.mxu0 %v1308
      %1351 = vmatprep.subr.bf16.mxu0 0
      %1352 = vmatpush1.bf16.msra.mxu0 %v1309
      %1353 = vmatprep.subr.bf16.mxu0 0
      %1354 = vmatpush1.bf16.msra.mxu0 %v1310
      %1355 = vmatprep.subr.bf16.mxu0 0
      %1356 = vmatpush1.bf16.msra.mxu0 %v1311
      %1357 = vmatprep.subr.bf16.mxu0 0
      %1358 = vmatpush1.bf16.msra.mxu0 %v1312
      %1359 = vmatprep.subr.bf16.mxu0 0
      %1360 = vmatpush1.bf16.msra.mxu0 %v1313
      %1361 = vmatprep.subr.bf16.mxu0 0
      %1362 = vmatpush1.bf16.msra.mxu0 %v1314
      %1363 = vmatprep.mubr.bf16.mxu0 %v1202
      %1364 = vmatmul.mubr.bf16.gmra.mrb[0].mxu0 %v1201
      %v1365 = vpop.f32.mrb[0].mxu0
      %v1366 = vadd.f32 0.0, %v1365
      %v1367 = vpop.f32.mrb[0].mxu0
      %v1368 = vpop.f32.mrb[0].mxu0
      %v1369 = vadd.f32 0.0, %v1368
      %v1370 = vpop.f32.mrb[0].mxu0
      %1371 = vdwg.mxu0
      %v1372 = vmax.f32 %v1366, 1e-10
      %v1373 = vmax.f32 %v1369, 1e-10
      %v1374 = vlog2.pop %v1372
      %v1375 = vmul.f32 %v1374, 0.6931472
      %v1376 = vlog2.pop %v1373
      %v1377 = vmul.f32 %v1376, 0.6931472
      %v1378 = vmul.f32 %v1375, 4.3429446
      %v1379 = vmul.f32 %v1377, 4.3429446
      %1380 = vst [vmem:[%s245] sm:$0xff] %v1378
      %1381 = vst [vmem:[%s245 + $0x8] sm:$0xff] %v1379
      %s1382 = smul.u32 %s21, 16
      %v1383 = vlaneseq
      %v1384 = vshrl.u32 %v1383, 7
      %v1385 = vadd.s32 %v1384, 8
      %s1386 = ssub.s32 11, %s1382
      %v1387 = vstv %s1386
      %vm1388 = vcmp.lt.s32.totalorder %v1384, %v1387
      %vm1389 = vcmp.lt.s32.totalorder %v1385, %v1387
      %v1390 = vsel %vm1388, %v1378, -1e+30
      %v1391 = vsel %vm1389, %v1379, -1e+30
      %v1392 = vmax.f32 %v1390, %v1391
      %v1393 = vrot.slane %v1392, 4
      %v1394 = vmax.f32 %v1392, %v1393
      %v1395 = vrot.slane %v1394, 2
      %v1396 = vmax.f32 %v1394, %v1395
      %v1397 = vrot.slane %v1396, 1
      %v1398 = vmax.f32 %v1396, %v1397
      %1399 = vst [vmem:[%s253] sm:$0xff] %v1398
      %s1400 = smul.u32 2, %s21
      %p1401 = scmp.lt.s32.totalorder %s20, 1
      %s1402 = scalar_select %p1401, %s20, 1
      %p1403 = scmp.lt.s32.totalorder %s1400, 1
      %s1404 = scalar_select %p1403, %s1400, 1
      %s1405 = smul.addr %s1402, 2
      %s1406 = sadd.s32 %s1404, %s1405
      %s1407 = smul.addr %s1406, 8
      %s1408 = scalar_lea.vmem %s3, %s1407
      %p1409 = scmp.lt.s32.totalorder %s20, 1
      %s1410 = scalar_select %p1409, %s20, 1
      %p1411 = scmp.lt.s32.totalorder %s21, 0
      %s1412 = scalar_select %p1411, %s21, 0
      %s1413 = sadd.s32 %s1412, %s1410
      %s1414 = smul.addr %s1413, 8
      %s1415 = scalar_lea.vmem %s4, %s1414
      // Predicated region
      $region33: #{_forward_impl.1} parent=31 // pred_check
        %p1416 = pneg %p118
      $region34: #{_forward_impl.1} parent=31 // pred_check_branch
        %1418 = sbr.rel (%p1416) target = $region36
      $region35: #{_forward_impl.1} parent=31 // pred_region
        %s1419 = smul.u32 2, %s21
      $region36: #{_forward_impl.1} parent=31 // pred_fallthru
        _
      // Predicated region
      $region37: #{_forward_impl.1} parent=31 // pred_check
        %p1420 = pneg %p146
      $region38: #{_forward_impl.1} parent=31 // pred_check_branch
        %1422 = sbr.rel (%p1420) target = $region40
      $region39: #{_forward_impl.1} parent=31 // pred_region
        _
      $region40: #{_forward_impl.1} parent=31 // pred_fallthru
        _
    $region32: #{_forward_impl.1} parent=5 // pred_fallthru
      _
    %p1423 = scmp.le.s32.totalorder 2, %s11
    // Predicated region
    $region41: #{_forward_impl.1} parent=5 // pred_check
      %p1424 = pneg %p1423
    $region42: #{_forward_impl.1} parent=5 // pred_check_branch
      %1426 = sbr.rel (%p1424) target = $region44
    $region43: #{_forward_impl.1} parent=5 // pred_region
      %s1427 = ssub.s32 %s11, 2
      // Predicated region
      $region45: #{_forward_impl.1} parent=43 // pred_check
        %p1428 = pneg %p124
      $region46: #{_forward_impl.1} parent=43 // pred_check_branch
        %1430 = sbr.rel (%p1428) target = $region48
      $region47: #{_forward_impl.1} parent=43 // pred_region
        %s1431 = smul.u32 2, %s23
        %p1432 = scmp.lt.s32.totalorder %s22, 1
        %s1433 = scalar_select %p1432, %s22, 1
        %p1434 = scmp.lt.s32.totalorder %s1431, 1
        %s1435 = scalar_select %p1434, %s1431, 1
        %s1436 = smul.addr %s1433, 2
        %s1437 = sadd.s32 %s1435, %s1436
        %s1438 = smul.addr %s1437, 8
        %s1439 = scalar_lea.vmem %s3, %s1438
      $region48: #{_forward_impl.1} parent=43 // pred_fallthru
        _
      // Predicated region
      $region49: #{_forward_impl.1} parent=43 // pred_check
        %p1440 = pneg %p152
      $region50: #{_forward_impl.1} parent=43 // pred_check_branch
        %1442 = sbr.rel (%p1440) target = $region52
      $region51: #{_forward_impl.1} parent=43 // pred_region
        %p1443 = scmp.lt.s32.totalorder %s22, 1
        %s1444 = scalar_select %p1443, %s22, 1
        %p1445 = scmp.lt.s32.totalorder %s23, 0
        %s1446 = scalar_select %p1445, %s23, 0
        %s1447 = sadd.s32 %s1446, %s1444
        %s1448 = smul.addr %s1447, 8
        %s1449 = scalar_lea.vmem %s4, %s1448
      $region52: #{_forward_impl.1} parent=43 // pred_fallthru
        _
    $region44: #{_forward_impl.1} parent=5 // pred_fallthru
      _
  $region6: #{_forward_impl.1} parent=0 // loop_footer
    %s15 = sadd.s32 1, %s11
  $region7: #{_forward_impl.1} parent=0 // loop_footer_branch
    %10 = sbr.rel target = $region3
  $region8: #{_forward_impl.1} parent=0 // loop_exit
    _

</llo_original>
